<compile_context>
chip_gen: v7x
topology: tpu7x:2x2x1
jax: 0.10.0
libtpu: 0.0.40
codegen_flags: <defaults>
</compile_context>

<pallas_src>
import functools

import jax
import jax.numpy as jnp
from jax import lax
from jax.experimental import pallas as pl
from jax.experimental.pallas import tpu as pltpu


# ----------------------------- fused Pallas kernel ---------------------------

def _fused_core_kernel(x_ref, label_ref, dists_ref, lower_ref, wc_ref, bc_ref,
                       wi_ref, bi_ref, pred_ref, inten_ref, recon_ref,
                       sums_ref, *, r_valid):
    # x_ref/label_ref: [S, H, T]   dists_ref: [H, T]   lower_ref: [H, H]
    # wc: [S, 5+S]  bc: [1, 5+S]  wi: [6, 1]  bi: [1, 1]   (SMEM scalars)
    # r_valid: number of valid lanes along the whole padded ray axis, or None.
    S, H, T = x_ref.shape
    C = pred_ref.shape[0]
    f32 = jnp.float32

    # ---- constant_net: 1x1 conv (K=S) + sigmoid, unrolled VPU FMAs.
    # Only the 5 constant maps stay live in vregs; the inconstant maps are
    # stored to pred_ref and re-read below (reduced liveness -> no spills).
    cmaps = []
    for c in range(C):
        acc = wc_ref[0, c] * x_ref[0] + bc_ref[0, c]
        for s in range(1, S):
            acc = acc + wc_ref[s, c] * x_ref[s]
        m = jax.nn.sigmoid(acc)
        pred_ref[c] = m
        if c < 5:
            cmaps.append(m)

    alpha, beta, rho_b, rho_s, phi = cmaps

    # ---- convolutional-ultrasound render (expected-value form).
    # TODO(synk): reference renderer also does Bernoulli scatterer sampling and
    # PSF convolutions; a deterministic expected-value rendering is used here.
    br = beta * rho_b
    step_log = -(alpha * dists_ref[...]) + jnp.log(jnp.clip(1.0 - br, 1e-6, 1.0))
    # exclusive cumsum along depth == one strict-lower-triangular [H,H] matmul
    transmission = jnp.exp(
        jnp.dot(lower_ref[...], step_log, preferred_element_type=f32))
    intensity = transmission * (br + phi * rho_s)
    inten_ref[...] = intensity

    # ---- lane-validity mask for the padded ray axis (loss sums only).
    if r_valid is not None:
        lane = lax.broadcasted_iota(jnp.int32, (H, T), 1)
        mask = (lane < (r_valid - pl.program_id(0) * T)).astype(f32)
    else:
        mask = None

    # ---- syn MSE numerator: synthesized img broadcast over the S set members.
    syn_sq = f32(0.0)
    for s in range(S):
        d = intensity - label_ref[s]
        sq = d * d
        if mask is not None:
            sq = sq * mask
        syn_sq = syn_sq + jnp.sum(sq)

    # ---- inconstant_net reconstructions + recon MSE numerator (interleaved).
    base = (wi_ref[0, 0] * alpha + wi_ref[1, 0] * beta + wi_ref[2, 0] * rho_b
            + wi_ref[3, 0] * rho_s + wi_ref[4, 0] * phi + bi_ref[0, 0])
    recon_sq = f32(0.0)
    for s in range(S):
        r = jax.nn.sigmoid(base + wi_ref[5, 0] * pred_ref[5 + s])
        recon_ref[s] = r
        d = x_ref[s] - r
        sq = d * d
        if mask is not None:
            sq = sq * mask
        recon_sq = recon_sq + jnp.sum(sq)

    # ---- lane-dense (1, 8, 128) partials block: row0 = syn_sq, row1 = recon_sq
    rows = lax.broadcasted_iota(jnp.int32, sums_ref.shape, sums_ref.ndim - 2)
    sums_ref[...] = jnp.where(rows == 0, syn_sq,
                              jnp.where(rows == 1, recon_sq, f32(0.0)))


def _pick_lane_tile(total_lanes, height, live_temps, planes_per_block):
    """Largest lane tile (multiple of 128) under a vreg-liveness and VMEM
    budget; prefers >= 2 grid blocks so "parallel" can shard across the two
    TensorCores of a v7x chip."""
    sub_tiles = max(1, -(-height // 8))
    for cand in (512, 256, 128):
        if total_lanes % cand:
            continue
        # ~live_temps simultaneously-live [H, cand] f32 temps near 64 vregs
        if sub_tiles * (cand // 128) * live_temps > 64:
            continue
        # double-buffered VMEM working set well under the 32 MiB scoped default
        if 2 * planes_per_block * height * cand * 4 > 24 * 1024 * 1024:
            continue
        if cand != 128 and total_lanes // cand < 2:
            continue
        return cand
    return 128


def fused_forward_core(input_imgs, label_imgs, z_vals, Wc, bc, Wi, bi):
    """Runs the fused kernel; returns NCHW predicted maps, intensity (B,H,W),
    NCHW reconstructions, and the syn/recon squared-error numerators."""
    B, S, H, W = input_imgs.shape
    C = Wc.shape[1]
    f32 = jnp.float32

    x_f = input_imgs.astype(f32)
    lab_f = label_imgs.astype(f32)
    dz = z_vals[..., 1:] - z_vals[..., :-1]
    dists_bwh = jnp.concatenate([dz, dz[..., -1:]], axis=-1).astype(f32)  # (B,W,H)
    # strict lower-triangular ones: hoisted out of the kernel body (constant)
    lower = (jnp.arange(H)[:, None] > jnp.arange(H)[None, :]).astype(f32)

    live_temps = S + 10                 # 5 constant maps + S plane reads + temps
    planes_per_block = 3 * S + C + 2    # x + label + dists + pred + inten + recon
    smem = pl.BlockSpec(memory_space=pltpu.MemorySpace.SMEM)
    weights = (Wc.astype(f32), bc.astype(f32), Wi.astype(f32), bi.astype(f32))

    if W % 128 == 0:
        # ---- transpose-free NCHW path: layout expressed purely via BlockSpecs
        tw = _pick_lane_tile(W, H, live_temps, planes_per_block)
        nW = W // tw
        dists = jnp.transpose(dists_bwh, (0, 2, 1))          # (B, H, W), tiny
        kernel = functools.partial(_fused_core_kernel, r_valid=None)
        pred, inten, recon, sums = pl.pallas_call(
            kernel,
            grid=(B, nW),
            in_specs=[
                pl.BlockSpec((None, S, H, tw), lambda b, j: (b, 0, 0, j)),
                pl.BlockSpec((None, S, H, tw), lambda b, j: (b, 0, 0, j)),
                pl.BlockSpec((None, H, tw), lambda b, j: (b, 0, j)),
                pl.BlockSpec((H, H), lambda b, j: (0, 0)),
                smem, smem, smem, smem,
            ],
            out_specs=[
                pl.BlockSpec((None, C, H, tw), lambda b, j: (b, 0, 0, j)),
                pl.BlockSpec((None, H, tw), lambda b, j: (b, 0, j)),
                pl.BlockSpec((None, S, H, tw), lambda b, j: (b, 0, 0, j)),
                pl.BlockSpec((1, 8, 128), lambda b, j: (b * nW + j, 0, 0)),
            ],
            out_shape=(
                jax.ShapeDtypeStruct((B, C, H, W), f32),
                jax.ShapeDtypeStruct((B, H, W), f32),
                jax.ShapeDtypeStruct((B, S, H, W), f32),
                jax.ShapeDtypeStruct((B * nW, 8, 128), f32),
            ),
            compiler_params=pltpu.CompilerParams(
                dimension_semantics=("parallel", "parallel")),
        )(x_f, lab_f, dists, lower, *weights)
        pred_nchw, intensity, recon_nchw = pred, inten, recon
    else:
        # ---- merged-ray path for small widths: depth on sublanes, rays on
        # lanes, ray axis padded to a multiple of 128 (lane-dense stores).
        R = B * W
        Rp = -(-R // 128) * 128
        x = jnp.transpose(x_f, (1, 2, 0, 3)).reshape(S, H, R)
        lab = jnp.transpose(lab_f, (1, 2, 0, 3)).reshape(S, H, R)
        dists = jnp.transpose(dists_bwh, (2, 0, 1)).reshape(H, R)
        if Rp != R:
            padr = Rp - R
            x = jnp.pad(x, ((0, 0), (0, 0), (0, padr)))
            lab = jnp.pad(lab, ((0, 0), (0, 0), (0, padr)))
            dists = jnp.pad(dists, ((0, 0), (0, padr)))
        tr = _pick_lane_tile(Rp, H, live_temps, planes_per_block)
        G = Rp // tr
        kernel = functools.partial(_fused_core_kernel,
                                   r_valid=R if Rp != R else None)
        pred, inten, recon, sums = pl.pallas_call(
            kernel,
            grid=(G,),
            in_specs=[
                pl.BlockSpec((S, H, tr), lambda i: (0, 0, i)),
                pl.BlockSpec((S, H, tr), lambda i: (0, 0, i)),
                pl.BlockSpec((H, tr), lambda i: (0, i)),
                pl.BlockSpec((H, H), lambda i: (0, 0)),
                smem, smem, smem, smem,
            ],
            out_specs=[
                pl.BlockSpec((C, H, tr), lambda i: (0, 0, i)),
                pl.BlockSpec((H, tr), lambda i: (0, i)),
                pl.BlockSpec((S, H, tr), lambda i: (0, 0, i)),
                pl.BlockSpec((1, 8, 128), lambda i: (i, 0, 0)),
            ],
            out_shape=(
                jax.ShapeDtypeStruct((C, H, Rp), f32),
                jax.ShapeDtypeStruct((H, Rp), f32),
                jax.ShapeDtypeStruct((S, H, Rp), f32),
                jax.ShapeDtypeStruct((G, 8, 128), f32),
            ),
            compiler_params=pltpu.CompilerParams(
                dimension_semantics=("parallel",)),
        )(x, lab, dists, lower, *weights)
        pred = pred[..., :R]
        inten = inten[..., :R]
        recon = recon[..., :R]
        pred_nchw = jnp.transpose(pred.reshape(C, H, B, W), (2, 0, 1, 3))
        intensity = jnp.transpose(inten.reshape(H, B, W), (1, 0, 2))
        recon_nchw = jnp.transpose(recon.reshape(S, H, B, W), (2, 0, 1, 3))

    syn_sq = jnp.sum(sums[:, 0, 0])
    recon_sq = jnp.sum(sums[:, 1, 0])
    return pred_nchw, intensity, recon_nchw, syn_sq, recon_sq


# ----------------------------- SSIM (plain-JAX glue) -------------------------

def _gaussian_window(size=11, sigma=1.5):
    coords = jnp.arange(size, dtype=jnp.float32) - (size - 1) / 2.0
    g = jnp.exp(-(coords ** 2) / (2.0 * sigma ** 2))
    g = g / jnp.sum(g)
    return jnp.outer(g, g)


def ssim(img1, img2, window_size=11, sigma=1.5):
    # TODO(synk): external `ssim` implementation not provided; standard
    # per-channel Gaussian-window SSIM (pytorch-ssim convention) kept in
    # plain-JAX glue (lax.conv) rather than a Pallas kernel.
    img1 = img1.astype(jnp.float32)
    img2 = img2.astype(jnp.float32)
    shape = jnp.broadcast_shapes(img1.shape, img2.shape)
    img1 = jnp.broadcast_to(img1, shape)
    img2 = jnp.broadcast_to(img2, shape)
    C = shape[1]
    win = jnp.tile(_gaussian_window(window_size, sigma)[None, None],
                   (C, 1, 1, 1))
    pad = window_size // 2
    conv = lambda x: lax.conv_general_dilated(
        x, win, window_strides=(1, 1), padding=[(pad, pad), (pad, pad)],
        dimension_numbers=('NCHW', 'OIHW', 'NCHW'), feature_group_count=C)
    mu1, mu2 = conv(img1), conv(img2)
    mu1_sq, mu2_sq, mu1_mu2 = mu1 * mu1, mu2 * mu2, mu1 * mu2
    s1 = conv(img1 * img1) - mu1_sq
    s2 = conv(img2 * img2) - mu2_sq
    s12 = conv(img1 * img2) - mu1_mu2
    C1, C2 = 0.01 ** 2, 0.03 ** 2
    ssim_map = ((2 * mu1_mu2 + C1) * (2 * s12 + C2)) / \
               ((mu1_sq + mu2_sq + C1) * (s1 + s2 + C2))
    return jnp.mean(ssim_map)


# ------------------------------- Model ---------------------------------------

class UltraDecoderNMapModel:
    def __init__(self, set_size=4, height=16, width=16, batch_size=2,
                 near=0.0, far=0.014, loss_coef=0.5, lindisp=False, seed=0):
        self.set_size = set_size
        self.height = height
        self.width = width
        self.batch_size = batch_size
        self.near = near
        self.far = far
        self.coef = loss_coef
        self.lindisp = lindisp
        # TODO(synk): constant_net / inconstant_net are external nn.Modules in
        # the reference; deterministic synthetic 1x1-conv parameters are used.
        key = jax.random.PRNGKey(seed)
        k1, k2, k3, k4 = jax.random.split(key, 4)
        self.Wc = 0.5 * jax.random.normal(k1, (set_size, 5 + set_size), jnp.float32)
        self.bc = 0.1 * jax.random.normal(k2, (1, 5 + set_size), jnp.float32)
        self.Wi = 0.5 * jax.random.normal(k3, (6, 1), jnp.float32)
        self.bi = 0.1 * jax.random.normal(k4, (1, 1), jnp.float32)
        self.z_vals = self.get_z_vals()
        self.z_vals_test = self.z_vals[0:1]
        # whole forward is jitted: one dispatch, XLA fuses layout glue & scalars
        self._forward_jit = jax.jit(self._forward)

    def get_z_vals(self):
        t_vals = jnp.linspace(0.0, 1.0, self.height)
        near = jnp.full((self.width, 1), self.near, jnp.float32)
        far = jnp.full((self.width, 1), self.far, jnp.float32)
        if not self.lindisp:
            z = near * (1.0 - t_vals) + far * t_vals
        else:
            z = 1.0 / (1.0 / near * (1.0 - t_vals) + 1.0 / far * t_vals)
        return jnp.broadcast_to(z, (self.batch_size, self.width, self.height))

    def triplet_loss(self, input_x, inconstant_map):
        # Scalar bookkeeping on tiny data: plain JAX, fused by XLA under jit.
        anchor = input_x[:, -1]                                   # [1, H, W]
        data_diff = jnp.sum((input_x - anchor[:, None]) ** 2, axis=(-1, -2))
        dd = data_diff[0]                                         # [S]
        nonzero = dd != 0.0
        # TODO(synk): original filters zero entries then argmax/argmin over the
        # filtered array; equivalent here when only the anchor entry is zero.
        far_idx = jnp.argmax(jnp.where(nonzero, dd, -jnp.inf))
        near_idx = jnp.argmin(jnp.where(nonzero, dd, jnp.inf))
        mse = lambda a, b: jnp.mean((a - b) ** 2)
        input_far = mse(input_x[:, -1], jnp.take(input_x, far_idx, axis=1))
        input_near = mse(input_x[:, -1], jnp.take(input_x, near_idx, axis=1))
        feature_far = mse(inconstant_map[:, -1],
                          jnp.take(inconstant_map, far_idx, axis=1))
        feature_near = mse(inconstant_map[:, -1],
                           jnp.take(inconstant_map, near_idx, axis=1))
        feature_diff = feature_near - feature_far
        tanh_coeff = 100.0
        input_diff_tanh = (jnp.tanh(tanh_coeff * input_far)
                           - jnp.tanh(tanh_coeff * input_near))
        trip_loss = 1.0 * feature_diff + 1.0 * input_diff_tanh
        return jax.nn.relu(trip_loss)

    # -- forward --
    def forward(self, input_imgs, label_imgs):
        return self._forward_jit(input_imgs, label_imgs)

    def _forward(self, input_imgs, label_imgs):
        B, S, H, W = input_imgs.shape

        (pred_maps, intensity, reconstructed_imgs,
         syn_sq, recon_sq) = fused_forward_core(
            input_imgs, label_imgs, self.z_vals,
            self.Wc, self.bc, self.Wi, self.bi)

        constant_maps = pred_maps[:, 0:5]
        inconstant_maps = pred_maps[:, 5:]
        synthesized_img = intensity[:, None, :, :]

        rendered_dict = {
            'intensity_map': intensity,
            'attenuation_coeff': constant_maps[:, 0],
            'reflection_coeff': constant_maps[:, 1],
            'border probability': constant_maps[:, 2],
            'scatterers_density_coeff': constant_maps[:, 3],
            'scatter_amplitude': constant_maps[:, 4],
            'inconstant_map': inconstant_maps,
            'label': label_imgs,
        }

        n_img = float(B * S * H * W)
        syn_mse = syn_sq / n_img                 # MSELoss broadcasts syn over S
        recon_mse = recon_sq / n_img

        syn_ssim = 1.0 - ssim(synthesized_img, label_imgs)
        recon_ssim = 1.0 - ssim(input_imgs, reconstructed_imgs)

        vr_loss = jnp.float32(0.0)
        for i in range(self.batch_size):
            vr_loss = vr_loss + self.triplet_loss(input_imgs[i:i + 1],
                                                  inconstant_maps[i:i + 1])
        vr_loss = vr_loss / self.batch_size

        # Second constant_net pass on tile(synthesized_img, S): all S input
        # channels are identical, so the 1x1 conv collapses to an elementwise
        # affine + sigmoid of the intensity map; recomputed in plain JAX
        # instead of 5 extra kernel output planes (HBM-write bound on v5e/v6e).
        wc_sum5 = jnp.sum(self.Wc[:, :5], axis=0)                 # [5]
        map_ren = jax.nn.sigmoid(
            intensity[:, None, :, :] * wc_sum5[None, :, None, None]
            + self.bc[0, :5][None, :, None, None])
        map_us = constant_maps
        map_mse = jnp.mean((map_us - map_ren) ** 2)
        map_ssim = 1.0 - ssim(map_us, map_ren)
        map_loss = (1 - self.coef) * 4 * map_mse + self.coef * map_ssim

        loss = (1.0 * ((1 - self.coef) * 4 * syn_mse + self.coef * syn_ssim)
                + (1 - self.coef) * 4 * recon_mse + self.coef * recon_ssim
                + vr_loss + map_loss)

        return {
            'overall_loss': loss, 'syn_mse': syn_mse, 'syn_ssim': syn_ssim,
            'recon_mse': recon_mse, 'recon_ssim': recon_ssim,
            'recon_img': reconstructed_imgs, 'vr_loss': vr_loss,
            'map_loss': map_loss, 'map_ssim': 1 + map_ssim, 'map_mse': map_mse,
            'syn_img': synthesized_img, 'render_dict': rendered_dict,
        }


# ------------------------------- main -----------------------------------------

if __name__ == "__main__":
    B, S, H, W = 2, 4, 16, 16
    key = jax.random.PRNGKey(0)
    k_in, k_lab = jax.random.split(key)
    input_imgs = jax.random.uniform(k_in, (B, S, H, W), jnp.float32)
    label_imgs = jax.random.uniform(k_lab, (B, S, H, W), jnp.float32)

    model = UltraDecoderNMapModel(set_size=S, height=H, width=W, batch_size=B,
                                  near=0.0, far=0.014, loss_coef=0.5)
    out = model.forward(input_imgs, label_imgs)
    jax.block_until_ready(out['overall_loss'])
    assert out['overall_loss'].shape == ()
    assert out['recon_img'].shape == (B, S, H, W)
    assert out['syn_img'].shape == (B, 1, H, W)

    # Also exercise the transpose-free NCHW BlockSpec path (W multiple of 128).
    W2 = 128
    k_in2, k_lab2 = jax.random.split(jax.random.PRNGKey(1))
    input2 = jax.random.uniform(k_in2, (B, S, H, W2), jnp.float32)
    label2 = jax.random.uniform(k_lab2, (B, S, H, W2), jnp.float32)
    model2 = UltraDecoderNMapModel(set_size=S, height=H, width=W2,
                                   batch_size=B, near=0.0, far=0.014,
                                   loss_coef=0.5)
    out2 = model2.forward(input2, label2)
    jax.block_until_ready(out2['overall_loss'])
    assert out2['overall_loss'].shape == ()
    assert out2['recon_img'].shape == (B, S, H, W2)
    assert out2['syn_img'].shape == (B, 1, H, W2)

    print("KERNEL_OK")
</pallas_src>

<mosaic_0001>
module attributes {stable_mosaic.version = 11 : i64} {
  func.func @_fused_core_kernel(%arg0: i32, %arg1: memref<4x16x128xf32, #tpu.memory_space<vmem>>, %arg2: memref<4x16x128xf32, #tpu.memory_space<vmem>>, %arg3: memref<16x128xf32, #tpu.memory_space<vmem>>, %arg4: memref<16x16xf32, #tpu.memory_space<vmem>>, %arg5: memref<4x9xf32, #tpu.memory_space<smem>>, %arg6: memref<1x9xf32, #tpu.memory_space<smem>>, %arg7: memref<6x1xf32, #tpu.memory_space<smem>>, %arg8: memref<1x1xf32, #tpu.memory_space<smem>>, %arg9: memref<9x16x128xf32, #tpu.memory_space<vmem>>, %arg10: memref<16x128xf32, #tpu.memory_space<vmem>>, %arg11: memref<4x16x128xf32, #tpu.memory_space<vmem>>, %arg12: memref<1x8x128xf32, #tpu.memory_space<vmem>>) attributes {dimension_semantics = [#tpu.dimension_semantics<parallel>], iteration_bounds = array<i64: 1>, scalar_prefetch = 0 : i64, scratch_operands = 0 : i64, tpu.core_type = #tpu.core_type<tc>, window_params = [{transform_indices = @transform_0, window_bounds = array<i64: 4, 16, 128>}, {transform_indices = @transform_1, window_bounds = array<i64: 4, 16, 128>}, {transform_indices = @transform_2, window_bounds = array<i64: 16, 128>}, {pipeline_mode = #tpu.pipeline_mode<synchronous>, transform_indices = @transform_3, window_bounds = array<i64: 16, 16>}, {transform_indices = @transform_4, window_bounds = array<i64: 4, 9>}, {transform_indices = @transform_5, window_bounds = array<i64: 1, 9>}, {transform_indices = @transform_6, window_bounds = array<i64: 6, 1>}, {transform_indices = @transform_7, window_bounds = array<i64: 1, 1>}, {transform_indices = @transform_8, window_bounds = array<i64: 9, 16, 128>}, {transform_indices = @transform_9, window_bounds = array<i64: 16, 128>}, {transform_indices = @transform_10, window_bounds = array<i64: 4, 16, 128>}, {transform_indices = @transform_11, window_bounds = array<i64: 1, 8, 128>}]} {
    %c0 = arith.constant 0 : index
    %c0_0 = arith.constant 0 : index
    %0 = memref.load %arg5[%c0, %c0_0] : memref<4x9xf32, #tpu.memory_space<smem>>
    %c0_1 = arith.constant 0 : index
    %c0_2 = arith.constant 0 : index
    %c0_3 = arith.constant 0 : index
    %1 = vector.load %arg1[%c0_1, %c0_2, %c0_3] : memref<4x16x128xf32, #tpu.memory_space<vmem>>, vector<1x16x128xf32>
    %2 = vector.shape_cast %1 : vector<1x16x128xf32> to vector<16x128xf32>
    %3 = vector.broadcast %0 : f32 to vector<16x128xf32>
    %4 = arith.mulf %3, %2 : vector<16x128xf32>
    %c0_4 = arith.constant 0 : index
    %c0_5 = arith.constant 0 : index
    %5 = memref.load %arg6[%c0_4, %c0_5] : memref<1x9xf32, #tpu.memory_space<smem>>
    %6 = vector.broadcast %5 : f32 to vector<16x128xf32>
    %7 = arith.addf %4, %6 : vector<16x128xf32>
    %c1 = arith.constant 1 : index
    %c0_6 = arith.constant 0 : index
    %8 = memref.load %arg5[%c1, %c0_6] : memref<4x9xf32, #tpu.memory_space<smem>>
    %c1_7 = arith.constant 1 : index
    %c0_8 = arith.constant 0 : index
    %c0_9 = arith.constant 0 : index
    %9 = vector.load %arg1[%c1_7, %c0_8, %c0_9] : memref<4x16x128xf32, #tpu.memory_space<vmem>>, vector<1x16x128xf32>
    %10 = vector.shape_cast %9 : vector<1x16x128xf32> to vector<16x128xf32>
    %11 = vector.broadcast %8 : f32 to vector<16x128xf32>
    %12 = arith.mulf %11, %10 : vector<16x128xf32>
    %13 = arith.addf %7, %12 : vector<16x128xf32>
    %c2 = arith.constant 2 : index
    %c0_10 = arith.constant 0 : index
    %14 = memref.load %arg5[%c2, %c0_10] : memref<4x9xf32, #tpu.memory_space<smem>>
    %c2_11 = arith.constant 2 : index
    %c0_12 = arith.constant 0 : index
    %c0_13 = arith.constant 0 : index
    %15 = vector.load %arg1[%c2_11, %c0_12, %c0_13] : memref<4x16x128xf32, #tpu.memory_space<vmem>>, vector<1x16x128xf32>
    %16 = vector.shape_cast %15 : vector<1x16x128xf32> to vector<16x128xf32>
    %17 = vector.broadcast %14 : f32 to vector<16x128xf32>
    %18 = arith.mulf %17, %16 : vector<16x128xf32>
    %19 = arith.addf %13, %18 : vector<16x128xf32>
    %c3 = arith.constant 3 : index
    %c0_14 = arith.constant 0 : index
    %20 = memref.load %arg5[%c3, %c0_14] : memref<4x9xf32, #tpu.memory_space<smem>>
    %c3_15 = arith.constant 3 : index
    %c0_16 = arith.constant 0 : index
    %c0_17 = arith.constant 0 : index
    %21 = vector.load %arg1[%c3_15, %c0_16, %c0_17] : memref<4x16x128xf32, #tpu.memory_space<vmem>>, vector<1x16x128xf32>
    %22 = vector.shape_cast %21 : vector<1x16x128xf32> to vector<16x128xf32>
    %23 = vector.broadcast %20 : f32 to vector<16x128xf32>
    %24 = arith.mulf %23, %22 : vector<16x128xf32>
    %25 = arith.addf %19, %24 : vector<16x128xf32>
    %26 = arith.negf %25 : vector<16x128xf32>
    %27 = math.exp %26 : vector<16x128xf32>
    %cst = arith.constant 1.000000e+00 : f32
    %28 = vector.broadcast %cst : f32 to vector<16x128xf32>
    %29 = arith.addf %28, %27 : vector<16x128xf32>
    %30 = arith.divf %28, %29 : vector<16x128xf32>
    %c0_18 = arith.constant 0 : index
    %c0_19 = arith.constant 0 : index
    %c0_20 = arith.constant 0 : index
    %31 = vector.load %arg9[%c0_18, %c0_19, %c0_20] : memref<9x16x128xf32, #tpu.memory_space<vmem>>, vector<1x16x128xf32>
    %32 = vector.shape_cast %31 : vector<1x16x128xf32> to vector<16x128xf32>
    %33 = vector.shape_cast %30 : vector<16x128xf32> to vector<1x16x128xf32>
    tpu.vector_store %arg9[%c0_18, %c0_19, %c0_20], %33 {strides = array<i32>} : memref<9x16x128xf32, #tpu.memory_space<vmem>>, vector<1x16x128xf32>,
    %c0_21 = arith.constant 0 : index
    %c1_22 = arith.constant 1 : index
    %34 = memref.load %arg5[%c0_21, %c1_22] : memref<4x9xf32, #tpu.memory_space<smem>>
    %c0_23 = arith.constant 0 : index
    %c0_24 = arith.constant 0 : index
    %c0_25 = arith.constant 0 : index
    %35 = vector.load %arg1[%c0_23, %c0_24, %c0_25] : memref<4x16x128xf32, #tpu.memory_space<vmem>>, vector<1x16x128xf32>
    %36 = vector.shape_cast %35 : vector<1x16x128xf32> to vector<16x128xf32>
    %37 = vector.broadcast %34 : f32 to vector<16x128xf32>
    %38 = arith.mulf %37, %36 : vector<16x128xf32>
    %c0_26 = arith.constant 0 : index
    %c1_27 = arith.constant 1 : index
    %39 = memref.load %arg6[%c0_26, %c1_27] : memref<1x9xf32, #tpu.memory_space<smem>>
    %40 = vector.broadcast %39 : f32 to vector<16x128xf32>
    %41 = arith.addf %38, %40 : vector<16x128xf32>
    %c1_28 = arith.constant 1 : index
    %c1_29 = arith.constant 1 : index
    %42 = memref.load %arg5[%c1_28, %c1_29] : memref<4x9xf32, #tpu.memory_space<smem>>
    %c1_30 = arith.constant 1 : index
    %c0_31 = arith.constant 0 : index
    %c0_32 = arith.constant 0 : index
    %43 = vector.load %arg1[%c1_30, %c0_31, %c0_32] : memref<4x16x128xf32, #tpu.memory_space<vmem>>, vector<1x16x128xf32>
    %44 = vector.shape_cast %43 : vector<1x16x128xf32> to vector<16x128xf32>
    %45 = vector.broadcast %42 : f32 to vector<16x128xf32>
    %46 = arith.mulf %45, %44 : vector<16x128xf32>
    %47 = arith.addf %41, %46 : vector<16x128xf32>
    %c2_33 = arith.constant 2 : index
    %c1_34 = arith.constant 1 : index
    %48 = memref.load %arg5[%c2_33, %c1_34] : memref<4x9xf32, #tpu.memory_space<smem>>
    %c2_35 = arith.constant 2 : index
    %c0_36 = arith.constant 0 : index
    %c0_37 = arith.constant 0 : index
    %49 = vector.load %arg1[%c2_35, %c0_36, %c0_37] : memref<4x16x128xf32, #tpu.memory_space<vmem>>, vector<1x16x128xf32>
    %50 = vector.shape_cast %49 : vector<1x16x128xf32> to vector<16x128xf32>
    %51 = vector.broadcast %48 : f32 to vector<16x128xf32>
    %52 = arith.mulf %51, %50 : vector<16x128xf32>
    %53 = arith.addf %47, %52 : vector<16x128xf32>
    %c3_38 = arith.constant 3 : index
    %c1_39 = arith.constant 1 : index
    %54 = memref.load %arg5[%c3_38, %c1_39] : memref<4x9xf32, #tpu.memory_space<smem>>
    %c3_40 = arith.constant 3 : index
    %c0_41 = arith.constant 0 : index
    %c0_42 = arith.constant 0 : index
    %55 = vector.load %arg1[%c3_40, %c0_41, %c0_42] : memref<4x16x128xf32, #tpu.memory_space<vmem>>, vector<1x16x128xf32>
    %56 = vector.shape_cast %55 : vector<1x16x128xf32> to vector<16x128xf32>
    %57 = vector.broadcast %54 : f32 to vector<16x128xf32>
    %58 = arith.mulf %57, %56 : vector<16x128xf32>
    %59 = arith.addf %53, %58 : vector<16x128xf32>
    %60 = arith.negf %59 : vector<16x128xf32>
    %61 = math.exp %60 : vector<16x128xf32>
    %cst_43 = arith.constant 1.000000e+00 : f32
    %62 = vector.broadcast %cst_43 : f32 to vector<16x128xf32>
    %63 = arith.addf %62, %61 : vector<16x128xf32>
    %64 = arith.divf %62, %63 : vector<16x128xf32>
    %c1_44 = arith.constant 1 : index
    %c0_45 = arith.constant 0 : index
    %c0_46 = arith.constant 0 : index
    %65 = vector.load %arg9[%c1_44, %c0_45, %c0_46] : memref<9x16x128xf32, #tpu.memory_space<vmem>>, vector<1x16x128xf32>
    %66 = vector.shape_cast %65 : vector<1x16x128xf32> to vector<16x128xf32>
    %67 = vector.shape_cast %64 : vector<16x128xf32> to vector<1x16x128xf32>
    tpu.vector_store %arg9[%c1_44, %c0_45, %c0_46], %67 {strides = array<i32>} : memref<9x16x128xf32, #tpu.memory_space<vmem>>, vector<1x16x128xf32>,
    %c0_47 = arith.constant 0 : index
    %c2_48 = arith.constant 2 : index
    %68 = memref.load %arg5[%c0_47, %c2_48] : memref<4x9xf32, #tpu.memory_space<smem>>
    %c0_49 = arith.constant 0 : index
    %c0_50 = arith.constant 0 : index
    %c0_51 = arith.constant 0 : index
    %69 = vector.load %arg1[%c0_49, %c0_50, %c0_51] : memref<4x16x128xf32, #tpu.memory_space<vmem>>, vector<1x16x128xf32>
    %70 = vector.shape_cast %69 : vector<1x16x128xf32> to vector<16x128xf32>
    %71 = vector.broadcast %68 : f32 to vector<16x128xf32>
    %72 = arith.mulf %71, %70 : vector<16x128xf32>
    %c0_52 = arith.constant 0 : index
    %c2_53 = arith.constant 2 : index
    %73 = memref.load %arg6[%c0_52, %c2_53] : memref<1x9xf32, #tpu.memory_space<smem>>
    %74 = vector.broadcast %73 : f32 to vector<16x128xf32>
    %75 = arith.addf %72, %74 : vector<16x128xf32>
    %c1_54 = arith.constant 1 : index
    %c2_55 = arith.constant 2 : index
    %76 = memref.load %arg5[%c1_54, %c2_55] : memref<4x9xf32, #tpu.memory_space<smem>>
    %c1_56 = arith.constant 1 : index
    %c0_57 = arith.constant 0 : index
    %c0_58 = arith.constant 0 : index
    %77 = vector.load %arg1[%c1_56, %c0_57, %c0_58] : memref<4x16x128xf32, #tpu.memory_space<vmem>>, vector<1x16x128xf32>
    %78 = vector.shape_cast %77 : vector<1x16x128xf32> to vector<16x128xf32>
    %79 = vector.broadcast %76 : f32 to vector<16x128xf32>
    %80 = arith.mulf %79, %78 : vector<16x128xf32>
    %81 = arith.addf %75, %80 : vector<16x128xf32>
    %c2_59 = arith.constant 2 : index
    %c2_60 = arith.constant 2 : index
    %82 = memref.load %arg5[%c2_59, %c2_60] : memref<4x9xf32, #tpu.memory_space<smem>>
    %c2_61 = arith.constant 2 : index
    %c0_62 = arith.constant 0 : index
    %c0_63 = arith.constant 0 : index
    %83 = vector.load %arg1[%c2_61, %c0_62, %c0_63] : memref<4x16x128xf32, #tpu.memory_space<vmem>>, vector<1x16x128xf32>
    %84 = vector.shape_cast %83 : vector<1x16x128xf32> to vector<16x128xf32>
    %85 = vector.broadcast %82 : f32 to vector<16x128xf32>
    %86 = arith.mulf %85, %84 : vector<16x128xf32>
    %87 = arith.addf %81, %86 : vector<16x128xf32>
    %c3_64 = arith.constant 3 : index
    %c2_65 = arith.constant 2 : index
    %88 = memref.load %arg5[%c3_64, %c2_65] : memref<4x9xf32, #tpu.memory_space<smem>>
    %c3_66 = arith.constant 3 : index
    %c0_67 = arith.constant 0 : index
    %c0_68 = arith.constant 0 : index
    %89 = vector.load %arg1[%c3_66, %c0_67, %c0_68] : memref<4x16x128xf32, #tpu.memory_space<vmem>>, vector<1x16x128xf32>
    %90 = vector.shape_cast %89 : vector<1x16x128xf32> to vector<16x128xf32>
    %91 = vector.broadcast %88 : f32 to vector<16x128xf32>
    %92 = arith.mulf %91, %90 : vector<16x128xf32>
    %93 = arith.addf %87, %92 : vector<16x128xf32>
    %94 = arith.negf %93 : vector<16x128xf32>
    %95 = math.exp %94 : vector<16x128xf32>
    %cst_69 = arith.constant 1.000000e+00 : f32
    %96 = vector.broadcast %cst_69 : f32 to vector<16x128xf32>
    %97 = arith.addf %96, %95 : vector<16x128xf32>
    %98 = arith.divf %96, %97 : vector<16x128xf32>
    %c2_70 = arith.constant 2 : index
    %c0_71 = arith.constant 0 : index
    %c0_72 = arith.constant 0 : index
    %99 = vector.load %arg9[%c2_70, %c0_71, %c0_72] : memref<9x16x128xf32, #tpu.memory_space<vmem>>, vector<1x16x128xf32>
    %100 = vector.shape_cast %99 : vector<1x16x128xf32> to vector<16x128xf32>
    %101 = vector.shape_cast %98 : vector<16x128xf32> to vector<1x16x128xf32>
    tpu.vector_store %arg9[%c2_70, %c0_71, %c0_72], %101 {strides = array<i32>} : memref<9x16x128xf32, #tpu.memory_space<vmem>>, vector<1x16x128xf32>,
    %c0_73 = arith.constant 0 : index
    %c3_74 = arith.constant 3 : index
    %102 = memref.load %arg5[%c0_73, %c3_74] : memref<4x9xf32, #tpu.memory_space<smem>>
    %c0_75 = arith.constant 0 : index
    %c0_76 = arith.constant 0 : index
    %c0_77 = arith.constant 0 : index
    %103 = vector.load %arg1[%c0_75, %c0_76, %c0_77] : memref<4x16x128xf32, #tpu.memory_space<vmem>>, vector<1x16x128xf32>
    %104 = vector.shape_cast %103 : vector<1x16x128xf32> to vector<16x128xf32>
    %105 = vector.broadcast %102 : f32 to vector<16x128xf32>
    %106 = arith.mulf %105, %104 : vector<16x128xf32>
    %c0_78 = arith.constant 0 : index
    %c3_79 = arith.constant 3 : index
    %107 = memref.load %arg6[%c0_78, %c3_79] : memref<1x9xf32, #tpu.memory_space<smem>>
    %108 = vector.broadcast %107 : f32 to vector<16x128xf32>
    %109 = arith.addf %106, %108 : vector<16x128xf32>
    %c1_80 = arith.constant 1 : index
    %c3_81 = arith.constant 3 : index
    %110 = memref.load %arg5[%c1_80, %c3_81] : memref<4x9xf32, #tpu.memory_space<smem>>
    %c1_82 = arith.constant 1 : index
    %c0_83 = arith.constant 0 : index
    %c0_84 = arith.constant 0 : index
    %111 = vector.load %arg1[%c1_82, %c0_83, %c0_84] : memref<4x16x128xf32, #tpu.memory_space<vmem>>, vector<1x16x128xf32>
    %112 = vector.shape_cast %111 : vector<1x16x128xf32> to vector<16x128xf32>
    %113 = vector.broadcast %110 : f32 to vector<16x128xf32>
    %114 = arith.mulf %113, %112 : vector<16x128xf32>
    %115 = arith.addf %109, %114 : vector<16x128xf32>
    %c2_85 = arith.constant 2 : index
    %c3_86 = arith.constant 3 : index
    %116 = memref.load %arg5[%c2_85, %c3_86] : memref<4x9xf32, #tpu.memory_space<smem>>
    %c2_87 = arith.constant 2 : index
    %c0_88 = arith.constant 0 : index
    %c0_89 = arith.constant 0 : index
    %117 = vector.load %arg1[%c2_87, %c0_88, %c0_89] : memref<4x16x128xf32, #tpu.memory_space<vmem>>, vector<1x16x128xf32>
    %118 = vector.shape_cast %117 : vector<1x16x128xf32> to vector<16x128xf32>
    %119 = vector.broadcast %116 : f32 to vector<16x128xf32>
    %120 = arith.mulf %119, %118 : vector<16x128xf32>
    %121 = arith.addf %115, %120 : vector<16x128xf32>
    %c3_90 = arith.constant 3 : index
    %c3_91 = arith.constant 3 : index
    %122 = memref.load %arg5[%c3_90, %c3_91] : memref<4x9xf32, #tpu.memory_space<smem>>
    %c3_92 = arith.constant 3 : index
    %c0_93 = arith.constant 0 : index
    %c0_94 = arith.constant 0 : index
    %123 = vector.load %arg1[%c3_92, %c0_93, %c0_94] : memref<4x16x128xf32, #tpu.memory_space<vmem>>, vector<1x16x128xf32>
    %124 = vector.shape_cast %123 : vector<1x16x128xf32> to vector<16x128xf32>
    %125 = vector.broadcast %122 : f32 to vector<16x128xf32>
    %126 = arith.mulf %125, %124 : vector<16x128xf32>
    %127 = arith.addf %121, %126 : vector<16x128xf32>
    %128 = arith.negf %127 : vector<16x128xf32>
    %129 = math.exp %128 : vector<16x128xf32>
    %cst_95 = arith.constant 1.000000e+00 : f32
    %130 = vector.broadcast %cst_95 : f32 to vector<16x128xf32>
    %131 = arith.addf %130, %129 : vector<16x128xf32>
    %132 = arith.divf %130, %131 : vector<16x128xf32>
    %c3_96 = arith.constant 3 : index
    %c0_97 = arith.constant 0 : index
    %c0_98 = arith.constant 0 : index
    %133 = vector.load %arg9[%c3_96, %c0_97, %c0_98] : memref<9x16x128xf32, #tpu.memory_space<vmem>>, vector<1x16x128xf32>
    %134 = vector.shape_cast %133 : vector<1x16x128xf32> to vector<16x128xf32>
    %135 = vector.shape_cast %132 : vector<16x128xf32> to vector<1x16x128xf32>
    tpu.vector_store %arg9[%c3_96, %c0_97, %c0_98], %135 {strides = array<i32>} : memref<9x16x128xf32, #tpu.memory_space<vmem>>, vector<1x16x128xf32>,
    %c0_99 = arith.constant 0 : index
    %c4 = arith.constant 4 : index
    %136 = memref.load %arg5[%c0_99, %c4] : memref<4x9xf32, #tpu.memory_space<smem>>
    %c0_100 = arith.constant 0 : index
    %c0_101 = arith.constant 0 : index
    %c0_102 = arith.constant 0 : index
    %137 = vector.load %arg1[%c0_100, %c0_101, %c0_102] : memref<4x16x128xf32, #tpu.memory_space<vmem>>, vector<1x16x128xf32>
    %138 = vector.shape_cast %137 : vector<1x16x128xf32> to vector<16x128xf32>
    %139 = vector.broadcast %136 : f32 to vector<16x128xf32>
    %140 = arith.mulf %139, %138 : vector<16x128xf32>
    %c0_103 = arith.constant 0 : index
    %c4_104 = arith.constant 4 : index
    %141 = memref.load %arg6[%c0_103, %c4_104] : memref<1x9xf32, #tpu.memory_space<smem>>
    %142 = vector.broadcast %141 : f32 to vector<16x128xf32>
    %143 = arith.addf %140, %142 : vector<16x128xf32>
    %c1_105 = arith.constant 1 : index
    %c4_106 = arith.constant 4 : index
    %144 = memref.load %arg5[%c1_105, %c4_106] : memref<4x9xf32, #tpu.memory_space<smem>>
    %c1_107 = arith.constant 1 : index
    %c0_108 = arith.constant 0 : index
    %c0_109 = arith.constant 0 : index
    %145 = vector.load %arg1[%c1_107, %c0_108, %c0_109] : memref<4x16x128xf32, #tpu.memory_space<vmem>>, vector<1x16x128xf32>
    %146 = vector.shape_cast %145 : vector<1x16x128xf32> to vector<16x128xf32>
    %147 = vector.broadcast %144 : f32 to vector<16x128xf32>
    %148 = arith.mulf %147, %146 : vector<16x128xf32>
    %149 = arith.addf %143, %148 : vector<16x128xf32>
    %c2_110 = arith.constant 2 : index
    %c4_111 = arith.constant 4 : index
    %150 = memref.load %arg5[%c2_110, %c4_111] : memref<4x9xf32, #tpu.memory_space<smem>>
    %c2_112 = arith.constant 2 : index
    %c0_113 = arith.constant 0 : index
    %c0_114 = arith.constant 0 : index
    %151 = vector.load %arg1[%c2_112, %c0_113, %c0_114] : memref<4x16x128xf32, #tpu.memory_space<vmem>>, vector<1x16x128xf32>
    %152 = vector.shape_cast %151 : vector<1x16x128xf32> to vector<16x128xf32>
    %153 = vector.broadcast %150 : f32 to vector<16x128xf32>
    %154 = arith.mulf %153, %152 : vector<16x128xf32>
    %155 = arith.addf %149, %154 : vector<16x128xf32>
    %c3_115 = arith.constant 3 : index
    %c4_116 = arith.constant 4 : index
    %156 = memref.load %arg5[%c3_115, %c4_116] : memref<4x9xf32, #tpu.memory_space<smem>>
    %c3_117 = arith.constant 3 : index
    %c0_118 = arith.constant 0 : index
    %c0_119 = arith.constant 0 : index
    %157 = vector.load %arg1[%c3_117, %c0_118, %c0_119] : memref<4x16x128xf32, #tpu.memory_space<vmem>>, vector<1x16x128xf32>
    %158 = vector.shape_cast %157 : vector<1x16x128xf32> to vector<16x128xf32>
    %159 = vector.broadcast %156 : f32 to vector<16x128xf32>
    %160 = arith.mulf %159, %158 : vector<16x128xf32>
    %161 = arith.addf %155, %160 : vector<16x128xf32>
    %162 = arith.negf %161 : vector<16x128xf32>
    %163 = math.exp %162 : vector<16x128xf32>
    %cst_120 = arith.constant 1.000000e+00 : f32
    %164 = vector.broadcast %cst_120 : f32 to vector<16x128xf32>
    %165 = arith.addf %164, %163 : vector<16x128xf32>
    %166 = arith.divf %164, %165 : vector<16x128xf32>
    %c4_121 = arith.constant 4 : index
    %c0_122 = arith.constant 0 : index
    %c0_123 = arith.constant 0 : index
    %167 = vector.load %arg9[%c4_121, %c0_122, %c0_123] : memref<9x16x128xf32, #tpu.memory_space<vmem>>, vector<1x16x128xf32>
    %168 = vector.shape_cast %167 : vector<1x16x128xf32> to vector<16x128xf32>
    %169 = vector.shape_cast %166 : vector<16x128xf32> to vector<1x16x128xf32>
    tpu.vector_store %arg9[%c4_121, %c0_122, %c0_123], %169 {strides = array<i32>} : memref<9x16x128xf32, #tpu.memory_space<vmem>>, vector<1x16x128xf32>,
    %c0_124 = arith.constant 0 : index
    %c5 = arith.constant 5 : index
    %170 = memref.load %arg5[%c0_124, %c5] : memref<4x9xf32, #tpu.memory_space<smem>>
    %c0_125 = arith.constant 0 : index
    %c0_126 = arith.constant 0 : index
    %c0_127 = arith.constant 0 : index
    %171 = vector.load %arg1[%c0_125, %c0_126, %c0_127] : memref<4x16x128xf32, #tpu.memory_space<vmem>>, vector<1x16x128xf32>
    %172 = vector.shape_cast %171 : vector<1x16x128xf32> to vector<16x128xf32>
    %173 = vector.broadcast %170 : f32 to vector<16x128xf32>
    %174 = arith.mulf %173, %172 : vector<16x128xf32>
    %c0_128 = arith.constant 0 : index
    %c5_129 = arith.constant 5 : index
    %175 = memref.load %arg6[%c0_128, %c5_129] : memref<1x9xf32, #tpu.memory_space<smem>>
    %176 = vector.broadcast %175 : f32 to vector<16x128xf32>
    %177 = arith.addf %174, %176 : vector<16x128xf32>
    %c1_130 = arith.constant 1 : index
    %c5_131 = arith.constant 5 : index
    %178 = memref.load %arg5[%c1_130, %c5_131] : memref<4x9xf32, #tpu.memory_space<smem>>
    %c1_132 = arith.constant 1 : index
    %c0_133 = arith.constant 0 : index
    %c0_134 = arith.constant 0 : index
    %179 = vector.load %arg1[%c1_132, %c0_133, %c0_134] : memref<4x16x128xf32, #tpu.memory_space<vmem>>, vector<1x16x128xf32>
    %180 = vector.shape_cast %179 : vector<1x16x128xf32> to vector<16x128xf32>
    %181 = vector.broadcast %178 : f32 to vector<16x128xf32>
    %182 = arith.mulf %181, %180 : vector<16x128xf32>
    %183 = arith.addf %177, %182 : vector<16x128xf32>
    %c2_135 = arith.constant 2 : index
    %c5_136 = arith.constant 5 : index
    %184 = memref.load %arg5[%c2_135, %c5_136] : memref<4x9xf32, #tpu.memory_space<smem>>
    %c2_137 = arith.constant 2 : index
    %c0_138 = arith.constant 0 : index
    %c0_139 = arith.constant 0 : index
    %185 = vector.load %arg1[%c2_137, %c0_138, %c0_139] : memref<4x16x128xf32, #tpu.memory_space<vmem>>, vector<1x16x128xf32>
    %186 = vector.shape_cast %185 : vector<1x16x128xf32> to vector<16x128xf32>
    %187 = vector.broadcast %184 : f32 to vector<16x128xf32>
    %188 = arith.mulf %187, %186 : vector<16x128xf32>
    %189 = arith.addf %183, %188 : vector<16x128xf32>
    %c3_140 = arith.constant 3 : index
    %c5_141 = arith.constant 5 : index
    %190 = memref.load %arg5[%c3_140, %c5_141] : memref<4x9xf32, #tpu.memory_space<smem>>
    %c3_142 = arith.constant 3 : index
    %c0_143 = arith.constant 0 : index
    %c0_144 = arith.constant 0 : index
    %191 = vector.load %arg1[%c3_142, %c0_143, %c0_144] : memref<4x16x128xf32, #tpu.memory_space<vmem>>, vector<1x16x128xf32>
    %192 = vector.shape_cast %191 : vector<1x16x128xf32> to vector<16x128xf32>
    %193 = vector.broadcast %190 : f32 to vector<16x128xf32>
    %194 = arith.mulf %193, %192 : vector<16x128xf32>
    %195 = arith.addf %189, %194 : vector<16x128xf32>
    %196 = arith.negf %195 : vector<16x128xf32>
    %197 = math.exp %196 : vector<16x128xf32>
    %cst_145 = arith.constant 1.000000e+00 : f32
    %198 = vector.broadcast %cst_145 : f32 to vector<16x128xf32>
    %199 = arith.addf %198, %197 : vector<16x128xf32>
    %200 = arith.divf %198, %199 : vector<16x128xf32>
    %c5_146 = arith.constant 5 : index
    %c0_147 = arith.constant 0 : index
    %c0_148 = arith.constant 0 : index
    %201 = vector.load %arg9[%c5_146, %c0_147, %c0_148] : memref<9x16x128xf32, #tpu.memory_space<vmem>>, vector<1x16x128xf32>
    %202 = vector.shape_cast %201 : vector<1x16x128xf32> to vector<16x128xf32>
    %203 = vector.shape_cast %200 : vector<16x128xf32> to vector<1x16x128xf32>
    tpu.vector_store %arg9[%c5_146, %c0_147, %c0_148], %203 {strides = array<i32>} : memref<9x16x128xf32, #tpu.memory_space<vmem>>, vector<1x16x128xf32>,
    %c0_149 = arith.constant 0 : index
    %c6 = arith.constant 6 : index
    %204 = memref.load %arg5[%c0_149, %c6] : memref<4x9xf32, #tpu.memory_space<smem>>
    %c0_150 = arith.constant 0 : index
    %c0_151 = arith.constant 0 : index
    %c0_152 = arith.constant 0 : index
    %205 = vector.load %arg1[%c0_150, %c0_151, %c0_152] : memref<4x16x128xf32, #tpu.memory_space<vmem>>, vector<1x16x128xf32>
    %206 = vector.shape_cast %205 : vector<1x16x128xf32> to vector<16x128xf32>
    %207 = vector.broadcast %204 : f32 to vector<16x128xf32>
    %208 = arith.mulf %207, %206 : vector<16x128xf32>
    %c0_153 = arith.constant 0 : index
    %c6_154 = arith.constant 6 : index
    %209 = memref.load %arg6[%c0_153, %c6_154] : memref<1x9xf32, #tpu.memory_space<smem>>
    %210 = vector.broadcast %209 : f32 to vector<16x128xf32>
    %211 = arith.addf %208, %210 : vector<16x128xf32>
    %c1_155 = arith.constant 1 : index
    %c6_156 = arith.constant 6 : index
    %212 = memref.load %arg5[%c1_155, %c6_156] : memref<4x9xf32, #tpu.memory_space<smem>>
    %c1_157 = arith.constant 1 : index
    %c0_158 = arith.constant 0 : index
    %c0_159 = arith.constant 0 : index
    %213 = vector.load %arg1[%c1_157, %c0_158, %c0_159] : memref<4x16x128xf32, #tpu.memory_space<vmem>>, vector<1x16x128xf32>
    %214 = vector.shape_cast %213 : vector<1x16x128xf32> to vector<16x128xf32>
    %215 = vector.broadcast %212 : f32 to vector<16x128xf32>
    %216 = arith.mulf %215, %214 : vector<16x128xf32>
    %217 = arith.addf %211, %216 : vector<16x128xf32>
    %c2_160 = arith.constant 2 : index
    %c6_161 = arith.constant 6 : index
    %218 = memref.load %arg5[%c2_160, %c6_161] : memref<4x9xf32, #tpu.memory_space<smem>>
    %c2_162 = arith.constant 2 : index
    %c0_163 = arith.constant 0 : index
    %c0_164 = arith.constant 0 : index
    %219 = vector.load %arg1[%c2_162, %c0_163, %c0_164] : memref<4x16x128xf32, #tpu.memory_space<vmem>>, vector<1x16x128xf32>
    %220 = vector.shape_cast %219 : vector<1x16x128xf32> to vector<16x128xf32>
    %221 = vector.broadcast %218 : f32 to vector<16x128xf32>
    %222 = arith.mulf %221, %220 : vector<16x128xf32>
    %223 = arith.addf %217, %222 : vector<16x128xf32>
    %c3_165 = arith.constant 3 : index
    %c6_166 = arith.constant 6 : index
    %224 = memref.load %arg5[%c3_165, %c6_166] : memref<4x9xf32, #tpu.memory_space<smem>>
    %c3_167 = arith.constant 3 : index
    %c0_168 = arith.constant 0 : index
    %c0_169 = arith.constant 0 : index
    %225 = vector.load %arg1[%c3_167, %c0_168, %c0_169] : memref<4x16x128xf32, #tpu.memory_space<vmem>>, vector<1x16x128xf32>
    %226 = vector.shape_cast %225 : vector<1x16x128xf32> to vector<16x128xf32>
    %227 = vector.broadcast %224 : f32 to vector<16x128xf32>
    %228 = arith.mulf %227, %226 : vector<16x128xf32>
    %229 = arith.addf %223, %228 : vector<16x128xf32>
    %230 = arith.negf %229 : vector<16x128xf32>
    %231 = math.exp %230 : vector<16x128xf32>
    %cst_170 = arith.constant 1.000000e+00 : f32
    %232 = vector.broadcast %cst_170 : f32 to vector<16x128xf32>
    %233 = arith.addf %232, %231 : vector<16x128xf32>
    %234 = arith.divf %232, %233 : vector<16x128xf32>
    %c6_171 = arith.constant 6 : index
    %c0_172 = arith.constant 0 : index
    %c0_173 = arith.constant 0 : index
    %235 = vector.load %arg9[%c6_171, %c0_172, %c0_173] : memref<9x16x128xf32, #tpu.memory_space<vmem>>, vector<1x16x128xf32>
    %236 = vector.shape_cast %235 : vector<1x16x128xf32> to vector<16x128xf32>
    %237 = vector.shape_cast %234 : vector<16x128xf32> to vector<1x16x128xf32>
    tpu.vector_store %arg9[%c6_171, %c0_172, %c0_173], %237 {strides = array<i32>} : memref<9x16x128xf32, #tpu.memory_space<vmem>>, vector<1x16x128xf32>,
    %c0_174 = arith.constant 0 : index
    %c7 = arith.constant 7 : index
    %238 = memref.load %arg5[%c0_174, %c7] : memref<4x9xf32, #tpu.memory_space<smem>>
    %c0_175 = arith.constant 0 : index
    %c0_176 = arith.constant 0 : index
    %c0_177 = arith.constant 0 : index
    %239 = vector.load %arg1[%c0_175, %c0_176, %c0_177] : memref<4x16x128xf32, #tpu.memory_space<vmem>>, vector<1x16x128xf32>
    %240 = vector.shape_cast %239 : vector<1x16x128xf32> to vector<16x128xf32>
    %241 = vector.broadcast %238 : f32 to vector<16x128xf32>
    %242 = arith.mulf %241, %240 : vector<16x128xf32>
    %c0_178 = arith.constant 0 : index
    %c7_179 = arith.constant 7 : index
    %243 = memref.load %arg6[%c0_178, %c7_179] : memref<1x9xf32, #tpu.memory_space<smem>>
    %244 = vector.broadcast %243 : f32 to vector<16x128xf32>
    %245 = arith.addf %242, %244 : vector<16x128xf32>
    %c1_180 = arith.constant 1 : index
    %c7_181 = arith.constant 7 : index
    %246 = memref.load %arg5[%c1_180, %c7_181] : memref<4x9xf32, #tpu.memory_space<smem>>
    %c1_182 = arith.constant 1 : index
    %c0_183 = arith.constant 0 : index
    %c0_184 = arith.constant 0 : index
    %247 = vector.load %arg1[%c1_182, %c0_183, %c0_184] : memref<4x16x128xf32, #tpu.memory_space<vmem>>, vector<1x16x128xf32>
    %248 = vector.shape_cast %247 : vector<1x16x128xf32> to vector<16x128xf32>
    %249 = vector.broadcast %246 : f32 to vector<16x128xf32>
    %250 = arith.mulf %249, %248 : vector<16x128xf32>
    %251 = arith.addf %245, %250 : vector<16x128xf32>
    %c2_185 = arith.constant 2 : index
    %c7_186 = arith.constant 7 : index
    %252 = memref.load %arg5[%c2_185, %c7_186] : memref<4x9xf32, #tpu.memory_space<smem>>
    %c2_187 = arith.constant 2 : index
    %c0_188 = arith.constant 0 : index
    %c0_189 = arith.constant 0 : index
    %253 = vector.load %arg1[%c2_187, %c0_188, %c0_189] : memref<4x16x128xf32, #tpu.memory_space<vmem>>, vector<1x16x128xf32>
    %254 = vector.shape_cast %253 : vector<1x16x128xf32> to vector<16x128xf32>
    %255 = vector.broadcast %252 : f32 to vector<16x128xf32>
    %256 = arith.mulf %255, %254 : vector<16x128xf32>
    %257 = arith.addf %251, %256 : vector<16x128xf32>
    %c3_190 = arith.constant 3 : index
    %c7_191 = arith.constant 7 : index
    %258 = memref.load %arg5[%c3_190, %c7_191] : memref<4x9xf32, #tpu.memory_space<smem>>
    %c3_192 = arith.constant 3 : index
    %c0_193 = arith.constant 0 : index
    %c0_194 = arith.constant 0 : index
    %259 = vector.load %arg1[%c3_192, %c0_193, %c0_194] : memref<4x16x128xf32, #tpu.memory_space<vmem>>, vector<1x16x128xf32>
    %260 = vector.shape_cast %259 : vector<1x16x128xf32> to vector<16x128xf32>
    %261 = vector.broadcast %258 : f32 to vector<16x128xf32>
    %262 = arith.mulf %261, %260 : vector<16x128xf32>
    %263 = arith.addf %257, %262 : vector<16x128xf32>
    %264 = arith.negf %263 : vector<16x128xf32>
    %265 = math.exp %264 : vector<16x128xf32>
    %cst_195 = arith.constant 1.000000e+00 : f32
    %266 = vector.broadcast %cst_195 : f32 to vector<16x128xf32>
    %267 = arith.addf %266, %265 : vector<16x128xf32>
    %268 = arith.divf %266, %267 : vector<16x128xf32>
    %c7_196 = arith.constant 7 : index
    %c0_197 = arith.constant 0 : index
    %c0_198 = arith.constant 0 : index
    %269 = vector.load %arg9[%c7_196, %c0_197, %c0_198] : memref<9x16x128xf32, #tpu.memory_space<vmem>>, vector<1x16x128xf32>
    %270 = vector.shape_cast %269 : vector<1x16x128xf32> to vector<16x128xf32>
    %271 = vector.shape_cast %268 : vector<16x128xf32> to vector<1x16x128xf32>
    tpu.vector_store %arg9[%c7_196, %c0_197, %c0_198], %271 {strides = array<i32>} : memref<9x16x128xf32, #tpu.memory_space<vmem>>, vector<1x16x128xf32>,
    %c0_199 = arith.constant 0 : index
    %c8 = arith.constant 8 : index
    %272 = memref.load %arg5[%c0_199, %c8] : memref<4x9xf32, #tpu.memory_space<smem>>
    %c0_200 = arith.constant 0 : index
    %c0_201 = arith.constant 0 : index
    %c0_202 = arith.constant 0 : index
    %273 = vector.load %arg1[%c0_200, %c0_201, %c0_202] : memref<4x16x128xf32, #tpu.memory_space<vmem>>, vector<1x16x128xf32>
    %274 = vector.shape_cast %273 : vector<1x16x128xf32> to vector<16x128xf32>
    %275 = vector.broadcast %272 : f32 to vector<16x128xf32>
    %276 = arith.mulf %275, %274 : vector<16x128xf32>
    %c0_203 = arith.constant 0 : index
    %c8_204 = arith.constant 8 : index
    %277 = memref.load %arg6[%c0_203, %c8_204] : memref<1x9xf32, #tpu.memory_space<smem>>
    %278 = vector.broadcast %277 : f32 to vector<16x128xf32>
    %279 = arith.addf %276, %278 : vector<16x128xf32>
    %c1_205 = arith.constant 1 : index
    %c8_206 = arith.constant 8 : index
    %280 = memref.load %arg5[%c1_205, %c8_206] : memref<4x9xf32, #tpu.memory_space<smem>>
    %c1_207 = arith.constant 1 : index
    %c0_208 = arith.constant 0 : index
    %c0_209 = arith.constant 0 : index
    %281 = vector.load %arg1[%c1_207, %c0_208, %c0_209] : memref<4x16x128xf32, #tpu.memory_space<vmem>>, vector<1x16x128xf32>
    %282 = vector.shape_cast %281 : vector<1x16x128xf32> to vector<16x128xf32>
    %283 = vector.broadcast %280 : f32 to vector<16x128xf32>
    %284 = arith.mulf %283, %282 : vector<16x128xf32>
    %285 = arith.addf %279, %284 : vector<16x128xf32>
    %c2_210 = arith.constant 2 : index
    %c8_211 = arith.constant 8 : index
    %286 = memref.load %arg5[%c2_210, %c8_211] : memref<4x9xf32, #tpu.memory_space<smem>>
    %c2_212 = arith.constant 2 : index
    %c0_213 = arith.constant 0 : index
    %c0_214 = arith.constant 0 : index
    %287 = vector.load %arg1[%c2_212, %c0_213, %c0_214] : memref<4x16x128xf32, #tpu.memory_space<vmem>>, vector<1x16x128xf32>
    %288 = vector.shape_cast %287 : vector<1x16x128xf32> to vector<16x128xf32>
    %289 = vector.broadcast %286 : f32 to vector<16x128xf32>
    %290 = arith.mulf %289, %288 : vector<16x128xf32>
    %291 = arith.addf %285, %290 : vector<16x128xf32>
    %c3_215 = arith.constant 3 : index
    %c8_216 = arith.constant 8 : index
    %292 = memref.load %arg5[%c3_215, %c8_216] : memref<4x9xf32, #tpu.memory_space<smem>>
    %c3_217 = arith.constant 3 : index
    %c0_218 = arith.constant 0 : index
    %c0_219 = arith.constant 0 : index
    %293 = vector.load %arg1[%c3_217, %c0_218, %c0_219] : memref<4x16x128xf32, #tpu.memory_space<vmem>>, vector<1x16x128xf32>
    %294 = vector.shape_cast %293 : vector<1x16x128xf32> to vector<16x128xf32>
    %295 = vector.broadcast %292 : f32 to vector<16x128xf32>
    %296 = arith.mulf %295, %294 : vector<16x128xf32>
    %297 = arith.addf %291, %296 : vector<16x128xf32>
    %298 = arith.negf %297 : vector<16x128xf32>
    %299 = math.exp %298 : vector<16x128xf32>
    %cst_220 = arith.constant 1.000000e+00 : f32
    %300 = vector.broadcast %cst_220 : f32 to vector<16x128xf32>
    %301 = arith.addf %300, %299 : vector<16x128xf32>
    %302 = arith.divf %300, %301 : vector<16x128xf32>
    %c8_221 = arith.constant 8 : index
    %c0_222 = arith.constant 0 : index
    %c0_223 = arith.constant 0 : index
    %303 = vector.load %arg9[%c8_221, %c0_222, %c0_223] : memref<9x16x128xf32, #tpu.memory_space<vmem>>, vector<1x16x128xf32>
    %304 = vector.shape_cast %303 : vector<1x16x128xf32> to vector<16x128xf32>
    %305 = vector.shape_cast %302 : vector<16x128xf32> to vector<1x16x128xf32>
    tpu.vector_store %arg9[%c8_221, %c0_222, %c0_223], %305 {strides = array<i32>} : memref<9x16x128xf32, #tpu.memory_space<vmem>>, vector<1x16x128xf32>,
    %306 = arith.mulf %64, %98 : vector<16x128xf32>
    %c0_224 = arith.constant 0 : index
    %c0_225 = arith.constant 0 : index
    %307 = vector.load %arg3[%c0_224, %c0_225] : memref<16x128xf32, #tpu.memory_space<vmem>>, vector<16x128xf32>
    %308 = arith.mulf %30, %307 : vector<16x128xf32>
    %cst_226 = arith.constant 0.000000e+00 : f32
    %309 = vector.broadcast %cst_226 : f32 to vector<16x128xf32>
    %310 = arith.subf %309, %308 : vector<16x128xf32>
    %cst_227 = arith.constant 1.000000e+00 : f32
    %311 = vector.broadcast %cst_227 : f32 to vector<16x128xf32>
    %312 = arith.subf %311, %306 : vector<16x128xf32>
    %cst_228 = arith.constant 9.99999997E-7 : f32
    %cst_229 = arith.constant 1.000000e+00 : f32
    %313 = vector.broadcast %cst_228 : f32 to vector<16x128xf32>
    %314 = arith.maximumf %313, %312 : vector<16x128xf32>
    %315 = vector.broadcast %cst_229 : f32 to vector<16x128xf32>
    %316 = arith.minimumf %315, %314 : vector<16x128xf32>
    %317 = math.log %316 : vector<16x128xf32>
    %318 = arith.addf %310, %317 : vector<16x128xf32>
    %c0_230 = arith.constant 0 : index
    %c0_231 = arith.constant 0 : index
    %319 = vector.load %arg4[%c0_230, %c0_231] : memref<16x16xf32, #tpu.memory_space<vmem>>, vector<16x16xf32>
    %cst_232 = arith.constant dense<0.000000e+00> : vector<16x128xf32>
    %320 = tpu.matmul %319, %318, %cst_232 {dimension_numbers = #tpu.dot_dimension_numbers<[1], [0], [0], [1], [0, 0, 1, 1], [], []>} : vector<16x16xf32>, vector<16x128xf32>, vector<16x128xf32> -> vector<16x128xf32>
    %321 = math.exp %320 : vector<16x128xf32>
    %322 = arith.mulf %166, %132 : vector<16x128xf32>
    %323 = arith.addf %306, %322 : vector<16x128xf32>
    %324 = arith.mulf %321, %323 : vector<16x128xf32>
    %c0_233 = arith.constant 0 : index
    %c0_234 = arith.constant 0 : index
    %325 = vector.load %arg10[%c0_233, %c0_234] : memref<16x128xf32, #tpu.memory_space<vmem>>, vector<16x128xf32>
    tpu.vector_store %arg10[%c0_233, %c0_234], %324 {strides = array<i32>} : memref<16x128xf32, #tpu.memory_space<vmem>>, vector<16x128xf32>,
    %326 = tpu.iota {dimensions = array<i32: 1>} : vector<16x128xi32>
    %c128_i32 = arith.constant 128 : i32
    %327 = arith.muli %arg0, %c128_i32 : i32
    %c32_i32 = arith.constant 32 : i32
    %328 = arith.subi %c32_i32, %327 : i32
    %329 = vector.broadcast %328 : i32 to vector<16x128xi32>
    %330 = arith.cmpi slt, %326, %329 : vector<16x128xi32>
    %331 = arith.extui %330 : vector<16x128xi1> to vector<16x128xi32>
    %332 = arith.sitofp %331 : vector<16x128xi32> to vector<16x128xf32>
    %c0_235 = arith.constant 0 : index
    %c0_236 = arith.constant 0 : index
    %c0_237 = arith.constant 0 : index
    %333 = vector.load %arg2[%c0_235, %c0_236, %c0_237] : memref<4x16x128xf32, #tpu.memory_space<vmem>>, vector<1x16x128xf32>
    %334 = vector.shape_cast %333 : vector<1x16x128xf32> to vector<16x128xf32>
    %335 = arith.subf %324, %334 : vector<16x128xf32>
    %336 = arith.mulf %335, %335 : vector<16x128xf32>
    %337 = arith.mulf %336, %332 : vector<16x128xf32>
    %338 = vector.shape_cast %337 : vector<16x128xf32> to vector<1x16x128xf32>
    %cst_238 = arith.constant dense<0.000000e+00> : vector<1xf32>
    %339 = vector.multi_reduction <add>, %338, %cst_238 [1, 2] : vector<1x16x128xf32> to vector<1xf32>
    %340 = vector.shape_cast %339 : vector<1xf32> to vector<1x1x1xf32>
    %341 = vector.extract %340[0, 0, 0] : f32 from vector<1x1x1xf32>
    %cst_239 = arith.constant 0.000000e+00 : f32
    %342 = arith.addf %cst_239, %341 : f32
    %c1_240 = arith.constant 1 : index
    %c0_241 = arith.constant 0 : index
    %c0_242 = arith.constant 0 : index
    %343 = vector.load %arg2[%c1_240, %c0_241, %c0_242] : memref<4x16x128xf32, #tpu.memory_space<vmem>>, vector<1x16x128xf32>
    %344 = vector.shape_cast %343 : vector<1x16x128xf32> to vector<16x128xf32>
    %345 = arith.subf %324, %344 : vector<16x128xf32>
    %346 = arith.mulf %345, %345 : vector<16x128xf32>
    %347 = arith.mulf %346, %332 : vector<16x128xf32>
    %348 = vector.shape_cast %347 : vector<16x128xf32> to vector<1x16x128xf32>
    %cst_243 = arith.constant dense<0.000000e+00> : vector<1xf32>
    %349 = vector.multi_reduction <add>, %348, %cst_243 [1, 2] : vector<1x16x128xf32> to vector<1xf32>
    %350 = vector.shape_cast %349 : vector<1xf32> to vector<1x1x1xf32>
    %351 = vector.extract %350[0, 0, 0] : f32 from vector<1x1x1xf32>
    %352 = arith.addf %342, %351 : f32
    %c2_244 = arith.constant 2 : index
    %c0_245 = arith.constant 0 : index
    %c0_246 = arith.constant 0 : index
    %353 = vector.load %arg2[%c2_244, %c0_245, %c0_246] : memref<4x16x128xf32, #tpu.memory_space<vmem>>, vector<1x16x128xf32>
    %354 = vector.shape_cast %353 : vector<1x16x128xf32> to vector<16x128xf32>
    %355 = arith.subf %324, %354 : vector<16x128xf32>
    %356 = arith.mulf %355, %355 : vector<16x128xf32>
    %357 = arith.mulf %356, %332 : vector<16x128xf32>
    %358 = vector.shape_cast %357 : vector<16x128xf32> to vector<1x16x128xf32>
    %cst_247 = arith.constant dense<0.000000e+00> : vector<1xf32>
    %359 = vector.multi_reduction <add>, %358, %cst_247 [1, 2] : vector<1x16x128xf32> to vector<1xf32>
    %360 = vector.shape_cast %359 : vector<1xf32> to vector<1x1x1xf32>
    %361 = vector.extract %360[0, 0, 0] : f32 from vector<1x1x1xf32>
    %362 = arith.addf %352, %361 : f32
    %c3_248 = arith.constant 3 : index
    %c0_249 = arith.constant 0 : index
    %c0_250 = arith.constant 0 : index
    %363 = vector.load %arg2[%c3_248, %c0_249, %c0_250] : memref<4x16x128xf32, #tpu.memory_space<vmem>>, vector<1x16x128xf32>
    %364 = vector.shape_cast %363 : vector<1x16x128xf32> to vector<16x128xf32>
    %365 = arith.subf %324, %364 : vector<16x128xf32>
    %366 = arith.mulf %365, %365 : vector<16x128xf32>
    %367 = arith.mulf %366, %332 : vector<16x128xf32>
    %368 = vector.shape_cast %367 : vector<16x128xf32> to vector<1x16x128xf32>
    %cst_251 = arith.constant dense<0.000000e+00> : vector<1xf32>
    %369 = vector.multi_reduction <add>, %368, %cst_251 [1, 2] : vector<1x16x128xf32> to vector<1xf32>
    %370 = vector.shape_cast %369 : vector<1xf32> to vector<1x1x1xf32>
    %371 = vector.extract %370[0, 0, 0] : f32 from vector<1x1x1xf32>
    %372 = arith.addf %362, %371 : f32
    %c0_252 = arith.constant 0 : index
    %c0_253 = arith.constant 0 : index
    %373 = memref.load %arg7[%c0_252, %c0_253] : memref<6x1xf32, #tpu.memory_space<smem>>
    %374 = vector.broadcast %373 : f32 to vector<16x128xf32>
    %375 = arith.mulf %374, %30 : vector<16x128xf32>
    %c1_254 = arith.constant 1 : index
    %c0_255 = arith.constant 0 : index
    %376 = memref.load %arg7[%c1_254, %c0_255] : memref<6x1xf32, #tpu.memory_space<smem>>
    %377 = vector.broadcast %376 : f32 to vector<16x128xf32>
    %378 = arith.mulf %377, %64 : vector<16x128xf32>
    %379 = arith.addf %375, %378 : vector<16x128xf32>
    %c2_256 = arith.constant 2 : index
    %c0_257 = arith.constant 0 : index
    %380 = memref.load %arg7[%c2_256, %c0_257] : memref<6x1xf32, #tpu.memory_space<smem>>
    %381 = vector.broadcast %380 : f32 to vector<16x128xf32>
    %382 = arith.mulf %381, %98 : vector<16x128xf32>
    %383 = arith.addf %379, %382 : vector<16x128xf32>
    %c3_258 = arith.constant 3 : index
    %c0_259 = arith.constant 0 : index
    %384 = memref.load %arg7[%c3_258, %c0_259] : memref<6x1xf32, #tpu.memory_space<smem>>
    %385 = vector.broadcast %384 : f32 to vector<16x128xf32>
    %386 = arith.mulf %385, %132 : vector<16x128xf32>
    %387 = arith.addf %383, %386 : vector<16x128xf32>
    %c4_260 = arith.constant 4 : index
    %c0_261 = arith.constant 0 : index
    %388 = memref.load %arg7[%c4_260, %c0_261] : memref<6x1xf32, #tpu.memory_space<smem>>
    %389 = vector.broadcast %388 : f32 to vector<16x128xf32>
    %390 = arith.mulf %389, %166 : vector<16x128xf32>
    %391 = arith.addf %387, %390 : vector<16x128xf32>
    %c0_262 = arith.constant 0 : index
    %c0_263 = arith.constant 0 : index
    %392 = memref.load %arg8[%c0_262, %c0_263] : memref<1x1xf32, #tpu.memory_space<smem>>
    %393 = vector.broadcast %392 : f32 to vector<16x128xf32>
    %394 = arith.addf %391, %393 : vector<16x128xf32>
    %c5_264 = arith.constant 5 : index
    %c0_265 = arith.constant 0 : index
    %395 = memref.load %arg7[%c5_264, %c0_265] : memref<6x1xf32, #tpu.memory_space<smem>>
    %c5_266 = arith.constant 5 : index
    %c0_267 = arith.constant 0 : index
    %c0_268 = arith.constant 0 : index
    %396 = vector.load %arg9[%c5_266, %c0_267, %c0_268] : memref<9x16x128xf32, #tpu.memory_space<vmem>>, vector<1x16x128xf32>
    %397 = vector.shape_cast %396 : vector<1x16x128xf32> to vector<16x128xf32>
    %398 = vector.broadcast %395 : f32 to vector<16x128xf32>
    %399 = arith.mulf %398, %397 : vector<16x128xf32>
    %400 = arith.addf %394, %399 : vector<16x128xf32>
    %401 = arith.negf %400 : vector<16x128xf32>
    %402 = math.exp %401 : vector<16x128xf32>
    %cst_269 = arith.constant 1.000000e+00 : f32
    %403 = vector.broadcast %cst_269 : f32 to vector<16x128xf32>
    %404 = arith.addf %403, %402 : vector<16x128xf32>
    %405 = arith.divf %403, %404 : vector<16x128xf32>
    %c0_270 = arith.constant 0 : index
    %c0_271 = arith.constant 0 : index
    %c0_272 = arith.constant 0 : index
    %406 = vector.load %arg11[%c0_270, %c0_271, %c0_272] : memref<4x16x128xf32, #tpu.memory_space<vmem>>, vector<1x16x128xf32>
    %407 = vector.shape_cast %406 : vector<1x16x128xf32> to vector<16x128xf32>
    %408 = vector.shape_cast %405 : vector<16x128xf32> to vector<1x16x128xf32>
    tpu.vector_store %arg11[%c0_270, %c0_271, %c0_272], %408 {strides = array<i32>} : memref<4x16x128xf32, #tpu.memory_space<vmem>>, vector<1x16x128xf32>,
    %c0_273 = arith.constant 0 : index
    %c0_274 = arith.constant 0 : index
    %c0_275 = arith.constant 0 : index
    %409 = vector.load %arg1[%c0_273, %c0_274, %c0_275] : memref<4x16x128xf32, #tpu.memory_space<vmem>>, vector<1x16x128xf32>
    %410 = vector.shape_cast %409 : vector<1x16x128xf32> to vector<16x128xf32>
    %411 = arith.subf %410, %405 : vector<16x128xf32>
    %412 = arith.mulf %411, %411 : vector<16x128xf32>
    %413 = arith.mulf %412, %332 : vector<16x128xf32>
    %414 = vector.shape_cast %413 : vector<16x128xf32> to vector<1x16x128xf32>
    %cst_276 = arith.constant dense<0.000000e+00> : vector<1xf32>
    %415 = vector.multi_reduction <add>, %414, %cst_276 [1, 2] : vector<1x16x128xf32> to vector<1xf32>
    %416 = vector.shape_cast %415 : vector<1xf32> to vector<1x1x1xf32>
    %417 = vector.extract %416[0, 0, 0] : f32 from vector<1x1x1xf32>
    %cst_277 = arith.constant 0.000000e+00 : f32
    %418 = arith.addf %cst_277, %417 : f32
    %c5_278 = arith.constant 5 : index
    %c0_279 = arith.constant 0 : index
    %419 = memref.load %arg7[%c5_278, %c0_279] : memref<6x1xf32, #tpu.memory_space<smem>>
    %c6_280 = arith.constant 6 : index
    %c0_281 = arith.constant 0 : index
    %c0_282 = arith.constant 0 : index
    %420 = vector.load %arg9[%c6_280, %c0_281, %c0_282] : memref<9x16x128xf32, #tpu.memory_space<vmem>>, vector<1x16x128xf32>
    %421 = vector.shape_cast %420 : vector<1x16x128xf32> to vector<16x128xf32>
    %422 = vector.broadcast %419 : f32 to vector<16x128xf32>
    %423 = arith.mulf %422, %421 : vector<16x128xf32>
    %424 = arith.addf %394, %423 : vector<16x128xf32>
    %425 = arith.negf %424 : vector<16x128xf32>
    %426 = math.exp %425 : vector<16x128xf32>
    %cst_283 = arith.constant 1.000000e+00 : f32
    %427 = vector.broadcast %cst_283 : f32 to vector<16x128xf32>
    %428 = arith.addf %427, %426 : vector<16x128xf32>
    %429 = arith.divf %427, %428 : vector<16x128xf32>
    %c1_284 = arith.constant 1 : index
    %c0_285 = arith.constant 0 : index
    %c0_286 = arith.constant 0 : index
    %430 = vector.load %arg11[%c1_284, %c0_285, %c0_286] : memref<4x16x128xf32, #tpu.memory_space<vmem>>, vector<1x16x128xf32>
    %431 = vector.shape_cast %430 : vector<1x16x128xf32> to vector<16x128xf32>
    %432 = vector.shape_cast %429 : vector<16x128xf32> to vector<1x16x128xf32>
    tpu.vector_store %arg11[%c1_284, %c0_285, %c0_286], %432 {strides = array<i32>} : memref<4x16x128xf32, #tpu.memory_space<vmem>>, vector<1x16x128xf32>,
    %c1_287 = arith.constant 1 : index
    %c0_288 = arith.constant 0 : index
    %c0_289 = arith.constant 0 : index
    %433 = vector.load %arg1[%c1_287, %c0_288, %c0_289] : memref<4x16x128xf32, #tpu.memory_space<vmem>>, vector<1x16x128xf32>
    %434 = vector.shape_cast %433 : vector<1x16x128xf32> to vector<16x128xf32>
    %435 = arith.subf %434, %429 : vector<16x128xf32>
    %436 = arith.mulf %435, %435 : vector<16x128xf32>
    %437 = arith.mulf %436, %332 : vector<16x128xf32>
    %438 = vector.shape_cast %437 : vector<16x128xf32> to vector<1x16x128xf32>
    %cst_290 = arith.constant dense<0.000000e+00> : vector<1xf32>
    %439 = vector.multi_reduction <add>, %438, %cst_290 [1, 2] : vector<1x16x128xf32> to vector<1xf32>
    %440 = vector.shape_cast %439 : vector<1xf32> to vector<1x1x1xf32>
    %441 = vector.extract %440[0, 0, 0] : f32 from vector<1x1x1xf32>
    %442 = arith.addf %418, %441 : f32
    %c5_291 = arith.constant 5 : index
    %c0_292 = arith.constant 0 : index
    %443 = memref.load %arg7[%c5_291, %c0_292] : memref<6x1xf32, #tpu.memory_space<smem>>
    %c7_293 = arith.constant 7 : index
    %c0_294 = arith.constant 0 : index
    %c0_295 = arith.constant 0 : index
    %444 = vector.load %arg9[%c7_293, %c0_294, %c0_295] : memref<9x16x128xf32, #tpu.memory_space<vmem>>, vector<1x16x128xf32>
    %445 = vector.shape_cast %444 : vector<1x16x128xf32> to vector<16x128xf32>
    %446 = vector.broadcast %443 : f32 to vector<16x128xf32>
    %447 = arith.mulf %446, %445 : vector<16x128xf32>
    %448 = arith.addf %394, %447 : vector<16x128xf32>
    %449 = arith.negf %448 : vector<16x128xf32>
    %450 = math.exp %449 : vector<16x128xf32>
    %cst_296 = arith.constant 1.000000e+00 : f32
    %451 = vector.broadcast %cst_296 : f32 to vector<16x128xf32>
    %452 = arith.addf %451, %450 : vector<16x128xf32>
    %453 = arith.divf %451, %452 : vector<16x128xf32>
    %c2_297 = arith.constant 2 : index
    %c0_298 = arith.constant 0 : index
    %c0_299 = arith.constant 0 : index
    %454 = vector.load %arg11[%c2_297, %c0_298, %c0_299] : memref<4x16x128xf32, #tpu.memory_space<vmem>>, vector<1x16x128xf32>
    %455 = vector.shape_cast %454 : vector<1x16x128xf32> to vector<16x128xf32>
    %456 = vector.shape_cast %453 : vector<16x128xf32> to vector<1x16x128xf32>
    tpu.vector_store %arg11[%c2_297, %c0_298, %c0_299], %456 {strides = array<i32>} : memref<4x16x128xf32, #tpu.memory_space<vmem>>, vector<1x16x128xf32>,
    %c2_300 = arith.constant 2 : index
    %c0_301 = arith.constant 0 : index
    %c0_302 = arith.constant 0 : index
    %457 = vector.load %arg1[%c2_300, %c0_301, %c0_302] : memref<4x16x128xf32, #tpu.memory_space<vmem>>, vector<1x16x128xf32>
    %458 = vector.shape_cast %457 : vector<1x16x128xf32> to vector<16x128xf32>
    %459 = arith.subf %458, %453 : vector<16x128xf32>
    %460 = arith.mulf %459, %459 : vector<16x128xf32>
    %461 = arith.mulf %460, %332 : vector<16x128xf32>
    %462 = vector.shape_cast %461 : vector<16x128xf32> to vector<1x16x128xf32>
    %cst_303 = arith.constant dense<0.000000e+00> : vector<1xf32>
    %463 = vector.multi_reduction <add>, %462, %cst_303 [1, 2] : vector<1x16x128xf32> to vector<1xf32>
    %464 = vector.shape_cast %463 : vector<1xf32> to vector<1x1x1xf32>
    %465 = vector.extract %464[0, 0, 0] : f32 from vector<1x1x1xf32>
    %466 = arith.addf %442, %465 : f32
    %c5_304 = arith.constant 5 : index
    %c0_305 = arith.constant 0 : index
    %467 = memref.load %arg7[%c5_304, %c0_305] : memref<6x1xf32, #tpu.memory_space<smem>>
    %c8_306 = arith.constant 8 : index
    %c0_307 = arith.constant 0 : index
    %c0_308 = arith.constant 0 : index
    %468 = vector.load %arg9[%c8_306, %c0_307, %c0_308] : memref<9x16x128xf32, #tpu.memory_space<vmem>>, vector<1x16x128xf32>
    %469 = vector.shape_cast %468 : vector<1x16x128xf32> to vector<16x128xf32>
    %470 = vector.broadcast %467 : f32 to vector<16x128xf32>
    %471 = arith.mulf %470, %469 : vector<16x128xf32>
    %472 = arith.addf %394, %471 : vector<16x128xf32>
    %473 = arith.negf %472 : vector<16x128xf32>
    %474 = math.exp %473 : vector<16x128xf32>
    %cst_309 = arith.constant 1.000000e+00 : f32
    %475 = vector.broadcast %cst_309 : f32 to vector<16x128xf32>
    %476 = arith.addf %475, %474 : vector<16x128xf32>
    %477 = arith.divf %475, %476 : vector<16x128xf32>
    %c3_310 = arith.constant 3 : index
    %c0_311 = arith.constant 0 : index
    %c0_312 = arith.constant 0 : index
    %478 = vector.load %arg11[%c3_310, %c0_311, %c0_312] : memref<4x16x128xf32, #tpu.memory_space<vmem>>, vector<1x16x128xf32>
    %479 = vector.shape_cast %478 : vector<1x16x128xf32> to vector<16x128xf32>
    %480 = vector.shape_cast %477 : vector<16x128xf32> to vector<1x16x128xf32>
    tpu.vector_store %arg11[%c3_310, %c0_311, %c0_312], %480 {strides = array<i32>} : memref<4x16x128xf32, #tpu.memory_space<vmem>>, vector<1x16x128xf32>,
    %c3_313 = arith.constant 3 : index
    %c0_314 = arith.constant 0 : index
    %c0_315 = arith.constant 0 : index
    %481 = vector.load %arg1[%c3_313, %c0_314, %c0_315] : memref<4x16x128xf32, #tpu.memory_space<vmem>>, vector<1x16x128xf32>
    %482 = vector.shape_cast %481 : vector<1x16x128xf32> to vector<16x128xf32>
    %483 = arith.subf %482, %477 : vector<16x128xf32>
    %484 = arith.mulf %483, %483 : vector<16x128xf32>
    %485 = arith.mulf %484, %332 : vector<16x128xf32>
    %486 = vector.shape_cast %485 : vector<16x128xf32> to vector<1x16x128xf32>
    %cst_316 = arith.constant dense<0.000000e+00> : vector<1xf32>
    %487 = vector.multi_reduction <add>, %486, %cst_316 [1, 2] : vector<1x16x128xf32> to vector<1xf32>
    %488 = vector.shape_cast %487 : vector<1xf32> to vector<1x1x1xf32>
    %489 = vector.extract %488[0, 0, 0] : f32 from vector<1x1x1xf32>
    %490 = arith.addf %466, %489 : f32
    %491 = tpu.iota {dimensions = array<i32: 1>} : vector<1x8x128xi32>
    %c0_i32 = arith.constant 0 : i32
    %492 = vector.broadcast %c0_i32 : i32 to vector<1x8x128xi32>
    %493 = arith.cmpi eq, %491, %492 : vector<1x8x128xi32>
    %c1_i32 = arith.constant 1 : i32
    %494 = vector.broadcast %c1_i32 : i32 to vector<1x8x128xi32>
    %495 = arith.cmpi eq, %491, %494 : vector<1x8x128xi32>
    %cst_317 = arith.constant 0.000000e+00 : f32
    %496 = vector.broadcast %490 : f32 to vector<1x8x128xf32>
    %497 = vector.broadcast %cst_317 : f32 to vector<1x8x128xf32>
    %498 = arith.select %495, %496, %497 : vector<1x8x128xi1>, vector<1x8x128xf32>
    %499 = vector.broadcast %372 : f32 to vector<1x8x128xf32>
    %500 = arith.select %493, %499, %498 : vector<1x8x128xi1>, vector<1x8x128xf32>
    %c0_318 = arith.constant 0 : index
    %c0_319 = arith.constant 0 : index
    %c0_320 = arith.constant 0 : index
    %501 = vector.load %arg12[%c0_318, %c0_319, %c0_320] : memref<1x8x128xf32, #tpu.memory_space<vmem>>, vector<1x8x128xf32>
    tpu.vector_store %arg12[%c0_318, %c0_319, %c0_320], %500 {strides = array<i32>} : memref<1x8x128xf32, #tpu.memory_space<vmem>>, vector<1x8x128xf32>,
    return
  }
  func.func @transform_0(%arg0: i32) -> (i32, i32, i32) {
    %c0_i32 = arith.constant 0 : i32
    %c0_i32_0 = arith.constant 0 : i32
    %c0_i32_1 = arith.constant 0 : i32
    return %c0_i32, %c0_i32_0, %arg0 : i32, i32, i32
  }
  func.func @transform_1(%arg0: i32) -> (i32, i32, i32) {
    %c0_i32 = arith.constant 0 : i32
    %c0_i32_0 = arith.constant 0 : i32
    %c0_i32_1 = arith.constant 0 : i32
    return %c0_i32, %c0_i32_0, %arg0 : i32, i32, i32
  }
  func.func @transform_2(%arg0: i32) -> (i32, i32) {
    %c0_i32 = arith.constant 0 : i32
    %c0_i32_0 = arith.constant 0 : i32
    return %c0_i32, %arg0 : i32, i32
  }
  func.func @transform_3(%arg0: i32) -> (i32, i32) {
    %c0_i32 = arith.constant 0 : i32
    %c0_i32_0 = arith.constant 0 : i32
    %c0_i32_1 = arith.constant 0 : i32
    return %c0_i32, %c0_i32_0 : i32, i32
  }
  func.func @transform_4(%arg0: i32) -> (i32, i32) {
    %c0_i32 = arith.constant 0 : i32
    %c0_i32_0 = arith.constant 0 : i32
    %c0_i32_1 = arith.constant 0 : i32
    return %c0_i32, %c0_i32_0 : i32, i32
  }
  func.func @transform_5(%arg0: i32) -> (i32, i32) {
    %c0_i32 = arith.constant 0 : i32
    %c0_i32_0 = arith.constant 0 : i32
    %c0_i32_1 = arith.constant 0 : i32
    return %c0_i32, %c0_i32_0 : i32, i32
  }
  func.func @transform_6(%arg0: i32) -> (i32, i32) {
    %c0_i32 = arith.constant 0 : i32
    %c0_i32_0 = arith.constant 0 : i32
    %c0_i32_1 = arith.constant 0 : i32
    return %c0_i32, %c0_i32_0 : i32, i32
  }
  func.func @transform_7(%arg0: i32) -> (i32, i32) {
    %c0_i32 = arith.constant 0 : i32
    %c0_i32_0 = arith.constant 0 : i32
    %c0_i32_1 = arith.constant 0 : i32
    return %c0_i32, %c0_i32_0 : i32, i32
  }
  func.func @transform_8(%arg0: i32) -> (i32, i32, i32) {
    %c0_i32 = arith.constant 0 : i32
    %c0_i32_0 = arith.constant 0 : i32
    %c0_i32_1 = arith.constant 0 : i32
    return %c0_i32, %c0_i32_0, %arg0 : i32, i32, i32
  }
  func.func @transform_9(%arg0: i32) -> (i32, i32) {
    %c0_i32 = arith.constant 0 : i32
    %c0_i32_0 = arith.constant 0 : i32
    return %c0_i32, %arg0 : i32, i32
  }
  func.func @transform_10(%arg0: i32) -> (i32, i32, i32) {
    %c0_i32 = arith.constant 0 : i32
    %c0_i32_0 = arith.constant 0 : i32
    %c0_i32_1 = arith.constant 0 : i32
    return %c0_i32, %c0_i32_0, %arg0 : i32, i32, i32
  }
  func.func @transform_11(%arg0: i32) -> (i32, i32, i32) {
    %c0_i32 = arith.constant 0 : i32
    %c0_i32_0 = arith.constant 0 : i32
    %c0_i32_1 = arith.constant 0 : i32
    return %arg0, %c0_i32, %c0_i32_0 : i32, i32, i32
  }
}

</mosaic_0001>

<llo_original>
// kernel: _forward.1
$region0: #{_forward.1}
  #allocation0 [shape = 'u32[]', space=smem, size = 0x4, offset = 0x4, fixed_abs, tag = 'smem constant byte address 0x4 - core index']
  #allocation1 [shape = 'u32[144,128]{1,0:T(1,128)}', space=vmem, size = 0x12000, scoped, tag = 'internal scratch']
  #allocation2 [shape = 'f32[1,1]{1,0:T(1,128)S(6)}', space=smem, size = 0x200, scoped, tag = 'scoped memory for _forward.1']
  %s0 = inlined_call_operand.vmem [shape: f32[4,16,128], index: 0, kind: input, shape index: {}]
  %s1 = inlined_call_operand.vmem [shape: f32[4,16,128], index: 1, kind: input, shape index: {}]
  %s2 = inlined_call_operand.vmem [shape: f32[16,128], index: 2, kind: input, shape index: {}]
  %s3 = inlined_call_operand.vmem [shape: f32[16,16], index: 3, kind: input, shape index: {}]
  %s4 = inlined_call_operand.vmem [shape: f32[4,9], index: 4, kind: input, shape index: {}]
  %s5 = inlined_call_operand.vmem [shape: f32[1,9], index: 5, kind: input, shape index: {}]
  %s6 = inlined_call_operand.vmem [shape: f32[6,1], index: 6, kind: input, shape index: {}]
  %s7 = inlined_call_operand.<no memory space> [shape: f32[1,1], index: 7, kind: input, shape index: {}]
  %s8 = inlined_call_operand.vmem [shape: f32[9,16,128], index: 8, kind: output, shape index: {0}]
  %s9 = inlined_call_operand.vmem [shape: f32[16,128], index: 9, kind: output, shape index: {1}]
  %s10 = inlined_call_operand.vmem [shape: f32[4,16,128], index: 10, kind: output, shape index: {2}]
  %s11 = inlined_call_operand.vmem [shape: f32[1,8,128], index: 11, kind: output, shape index: {3}]
  %12 = xla_tuple %s8, %s9, %s10, %s11
  %s13 = sld [smem:[#allocation0]]
  $region78: #{_forward.1} parent=0
    _
  %s15 = ssub.s32 1, %s13
  %s16 = scalar_select 0, %s15, %s13
  %17 = sst [smem:[#allocation2]] %s7
  $region1: #{_forward.1} parent=0
    #allocation3 [shape = 'u8[2048]{0}', space=smem, size = 0x800, scoped, tag = 'input window, operand 4, single buffered']
    #allocation4 [shape = 's32[1]{0}', space=sflag, size = 0x4, scoped, tag = 'scoped memory for _forward.1']
    #allocation5 [shape = 'u8[512]{0}', space=smem, size = 0x200, scoped, tag = 'input window, operand 5, single buffered']
    #allocation6 [shape = 's32[1]{0}', space=sflag, size = 0x4, scoped, tag = 'scoped memory for _forward.1']
    #allocation7 [shape = 'u8[4096]{0}', space=smem, size = 0x1000, scoped, tag = 'input window, operand 6, single buffered']
    %18 = vsyncpa [#allocation4], 0
    %19 = vsyncpa [#allocation6], 0
    // Predicated region
    $region2: #{_forward.1} parent=1 // pred_check
      _
    $region3: #{_forward.1} parent=1 // pred_check_branch
      %21 = sbr.rel (0) target = $region5
    $region4: #{_forward.1} parent=1 // pred_region
      _
    $region5: #{_forward.1} parent=1 // pred_fallthru
      _
    // Predicated region
    $region6: #{_forward.1} parent=1 // pred_check
      _
    $region7: #{_forward.1} parent=1 // pred_check_branch
      %23 = sbr.rel (0) target = $region9
    $region8: #{_forward.1} parent=1 // pred_region
      _
    $region9: #{_forward.1} parent=1 // pred_fallthru
      _
    // Predicated region
    $region10: #{_forward.1} parent=1 // pred_check
      _
    $region11: #{_forward.1} parent=1 // pred_check_branch
      %25 = sbr.rel (0) target = $region13
    $region12: #{_forward.1} parent=1 // pred_region
      _
    $region13: #{_forward.1} parent=1 // pred_fallthru
      _
    // Predicated region
    $region14: #{_forward.1} parent=1 // pred_check
      _
    $region15: #{_forward.1} parent=1 // pred_check_branch
      %27 = sbr.rel (0) target = $region17
    $region16: #{_forward.1} parent=1 // pred_region
      _
    $region17: #{_forward.1} parent=1 // pred_fallthru
      _
    // Predicated region
    $region18: #{_forward.1} parent=1 // pred_check
      _
    $region19: #{_forward.1} parent=1 // pred_check_branch
      %29 = sbr.rel (0) target = $region21
    $region20: #{_forward.1} parent=1 // pred_region
      %s31 = ssub.s32 64, 64
      %32 = vsyncadd [#allocation4], %s31
      %s34 = sshll.u32 %s4, 4
      %s35 = int_to_ptr.vmem [resolvable:$true] %s34
      %37 = dma.vmem_to_smem %s35, 64, [#allocation3], [#allocation4]
    $region21: #{_forward.1} parent=1 // pred_fallthru
      _
    // Predicated region
    $region22: #{_forward.1} parent=1 // pred_check
      _
    $region23: #{_forward.1} parent=1 // pred_check_branch
      %39 = sbr.rel (0) target = $region25
    $region24: #{_forward.1} parent=1 // pred_region
      %s41 = ssub.s32 16, 16
      %42 = vsyncadd [#allocation6], %s41
      %s44 = sshll.u32 %s5, 4
      %s45 = int_to_ptr.vmem [resolvable:$true] %s44
      %47 = dma.vmem_to_smem %s45, 16, [#allocation5], [#allocation6]
    $region25: #{_forward.1} parent=1 // pred_fallthru
      _
    // Predicated region
    $region26: #{_forward.1} parent=1 // pred_check
      _
    $region27: #{_forward.1} parent=1 // pred_check_branch
      %49 = sbr.rel (0) target = $region29
    $region28: #{_forward.1} parent=1 // pred_region
      %s51 = ssub.s32 128, 128
      %52 = vsyncadd [#allocation6], %s51
      %s54 = sshll.u32 %s6, 4
      %s55 = int_to_ptr.vmem [resolvable:$true] %s54
      %57 = dma.vmem_to_smem %s55, 128, [#allocation7], [#allocation6]
    $region29: #{_forward.1} parent=1 // pred_fallthru
      _
    // Predicated region
    $region30: #{_forward.1} parent=1 // pred_check
      _
    $region31: #{_forward.1} parent=1 // pred_check_branch
      %59 = sbr.rel (0) target = $region33
    $region32: #{_forward.1} parent=1 // pred_region
      _
    $region33: #{_forward.1} parent=1 // pred_fallthru
      _
    // Predicated region
    $region34: #{_forward.1} parent=1 // pred_check
      _
    $region35: #{_forward.1} parent=1 // pred_check_branch
      %61 = sbr.rel (0) target = $region37
    $region36: #{_forward.1} parent=1 // pred_region
      %62 = dma.done [#allocation4], 64
    $region37: #{_forward.1} parent=1 // pred_fallthru
      _
    // Predicated region
    $region38: #{_forward.1} parent=1 // pred_check
      _
    $region39: #{_forward.1} parent=1 // pred_check_branch
      %64 = sbr.rel (0) target = $region41
    $region40: #{_forward.1} parent=1 // pred_region
      %65 = dma.done [#allocation6], 16
    $region41: #{_forward.1} parent=1 // pred_fallthru
      _
    // Predicated region
    $region42: #{_forward.1} parent=1 // pred_check
      _
    $region43: #{_forward.1} parent=1 // pred_check_branch
      %67 = sbr.rel (0) target = $region45
    $region44: #{_forward.1} parent=1 // pred_region
      %68 = dma.done [#allocation6], 128
    $region45: #{_forward.1} parent=1 // pred_fallthru
      _
    %69 = sfence
    %s70 = sld [smem:[#allocation3]]
    %v71 = vld [vmem:[%s0] sm:$0xff]
    %v72 = vld [vmem:[%s0 + $0x8] sm:$0xff]
    %v73 = vstv %s70
    %v74 = vmul.f32 %v73, %v71
    %v75 = vmul.f32 %v73, %v72
    %s76 = sld [smem:[#allocation5]]
    %v77 = vstv %s76
    %v78 = vadd.f32 %v74, %v77
    %v79 = vadd.f32 %v75, %v77
    %s80 = sld [smem:[#allocation3 + $0x80]]
    %s81 = scalar_lea.vmem %s0, 16
    %v82 = vld [vmem:[%s81] sm:$0xff]
    %v83 = vld [vmem:[%s81 + $0x8] sm:$0xff]
    %v84 = vstv %s80
    %v85 = vmul.f32 %v84, %v82
    %v86 = vmul.f32 %v84, %v83
    %v87 = vadd.f32 %v78, %v85
    %v88 = vadd.f32 %v79, %v86
    %s89 = sld [smem:[#allocation3 + $0x100]]
    %s90 = scalar_lea.vmem %s0, 32
    %v91 = vld [vmem:[%s90] sm:$0xff]
    %v92 = vld [vmem:[%s90 + $0x8] sm:$0xff]
    %v93 = vstv %s89
    %v94 = vmul.f32 %v93, %v91
    %v95 = vmul.f32 %v93, %v92
    %v96 = vadd.f32 %v87, %v94
    %v97 = vadd.f32 %v88, %v95
    %s98 = sld [smem:[#allocation3 + $0x180]]
    %s99 = scalar_lea.vmem %s0, 48
    %v100 = vld [vmem:[%s99] sm:$0xff]
    %v101 = vld [vmem:[%s99 + $0x8] sm:$0xff]
    %v102 = vstv %s98
    %v103 = vmul.f32 %v102, %v100
    %v104 = vmul.f32 %v102, %v101
    %v105 = vadd.f32 %v96, %v103
    %v106 = vadd.f32 %v97, %v104
    %v107 = vxor.u32 %v105, 2147483648
    %v108 = vxor.u32 %v106, 2147483648
    %v109 = vmul.f32 %v107, 1.442695
    %v110 = vpow.pop %v109
    %v111 = vmul.f32 %v108, 1.442695
    %v112 = vpow.pop %v111
    %v113 = vadd.f32 %v110, 1.0
    %v114 = vadd.f32 %v112, 1.0
    %v115 = vrcp.pop %v113
    %v116 = vmul.f32 1.0, %v115
    %v117 = vrcp.pop %v114
    %v118 = vmul.f32 1.0, %v117
    %119 = vst [vmem:[%s8] sm:$0xff] %v116
    %120 = vst [vmem:[%s8 + $0x8] sm:$0xff] %v118
    %s121 = sld [smem:[#allocation3 + $0x1]]
    %v122 = vld [vmem:[%s0] sm:$0xff]
    %v123 = vld [vmem:[%s0 + $0x8] sm:$0xff]
    %v124 = vstv %s121
    %v125 = vmul.f32 %v124, %v122
    %v126 = vmul.f32 %v124, %v123
    %s127 = sld [smem:[#allocation5 + $0x1]]
    %v128 = vstv %s127
    %v129 = vadd.f32 %v125, %v128
    %v130 = vadd.f32 %v126, %v128
    %s131 = sld [smem:[#allocation3 + $0x81]]
    %v132 = vld [vmem:[%s81] sm:$0xff]
    %v133 = vld [vmem:[%s81 + $0x8] sm:$0xff]
    %v134 = vstv %s131
    %v135 = vmul.f32 %v134, %v132
    %v136 = vmul.f32 %v134, %v133
    %v137 = vadd.f32 %v129, %v135
    %v138 = vadd.f32 %v130, %v136
    %s139 = sld [smem:[#allocation3 + $0x101]]
    %v140 = vld [vmem:[%s90] sm:$0xff]
    %v141 = vld [vmem:[%s90 + $0x8] sm:$0xff]
    %v142 = vstv %s139
    %v143 = vmul.f32 %v142, %v140
    %v144 = vmul.f32 %v142, %v141
    %v145 = vadd.f32 %v137, %v143
    %v146 = vadd.f32 %v138, %v144
    %s147 = sld [smem:[#allocation3 + $0x181]]
    %v148 = vld [vmem:[%s99] sm:$0xff]
    %v149 = vld [vmem:[%s99 + $0x8] sm:$0xff]
    %v150 = vstv %s147
    %v151 = vmul.f32 %v150, %v148
    %v152 = vmul.f32 %v150, %v149
    %v153 = vadd.f32 %v145, %v151
    %v154 = vadd.f32 %v146, %v152
    %v155 = vxor.u32 %v153, 2147483648
    %v156 = vxor.u32 %v154, 2147483648
    %v157 = vmul.f32 %v155, 1.442695
    %v158 = vpow.pop %v157
    %v159 = vmul.f32 %v156, 1.442695
    %v160 = vpow.pop %v159
    %v161 = vadd.f32 %v158, 1.0
    %v162 = vadd.f32 %v160, 1.0
    %v163 = vrcp.pop %v161
    %v164 = vmul.f32 1.0, %v163
    %v165 = vrcp.pop %v162
    %v166 = vmul.f32 1.0, %v165
    %s167 = scalar_lea.vmem %s8, 16
    %168 = vst [vmem:[%s167] sm:$0xff] %v164
    %169 = vst [vmem:[%s167 + $0x8] sm:$0xff] %v166
    %s170 = sld [smem:[#allocation3 + $0x2]]
    %v171 = vld [vmem:[%s0] sm:$0xff]
    %v172 = vld [vmem:[%s0 + $0x8] sm:$0xff]
    %v173 = vstv %s170
    %v174 = vmul.f32 %v173, %v171
    %v175 = vmul.f32 %v173, %v172
    %s176 = sld [smem:[#allocation5 + $0x2]]
    %v177 = vstv %s176
    %v178 = vadd.f32 %v174, %v177
    %v179 = vadd.f32 %v175, %v177
    %s180 = sld [smem:[#allocation3 + $0x82]]
    %v181 = vld [vmem:[%s81] sm:$0xff]
    %v182 = vld [vmem:[%s81 + $0x8] sm:$0xff]
    %v183 = vstv %s180
    %v184 = vmul.f32 %v183, %v181
    %v185 = vmul.f32 %v183, %v182
    %v186 = vadd.f32 %v178, %v184
    %v187 = vadd.f32 %v179, %v185
    %s188 = sld [smem:[#allocation3 + $0x102]]
    %v189 = vld [vmem:[%s90] sm:$0xff]
    %v190 = vld [vmem:[%s90 + $0x8] sm:$0xff]
    %v191 = vstv %s188
    %v192 = vmul.f32 %v191, %v189
    %v193 = vmul.f32 %v191, %v190
    %v194 = vadd.f32 %v186, %v192
    %v195 = vadd.f32 %v187, %v193
    %s196 = sld [smem:[#allocation3 + $0x182]]
    %v197 = vld [vmem:[%s99] sm:$0xff]
    %v198 = vld [vmem:[%s99 + $0x8] sm:$0xff]
    %v199 = vstv %s196
    %v200 = vmul.f32 %v199, %v197
    %v201 = vmul.f32 %v199, %v198
    %v202 = vadd.f32 %v194, %v200
    %v203 = vadd.f32 %v195, %v201
    %v204 = vxor.u32 %v202, 2147483648
    %v205 = vxor.u32 %v203, 2147483648
    %v206 = vmul.f32 %v204, 1.442695
    %v207 = vpow.pop %v206
    %v208 = vmul.f32 %v205, 1.442695
    %v209 = vpow.pop %v208
    %v210 = vadd.f32 %v207, 1.0
    %v211 = vadd.f32 %v209, 1.0
    %v212 = vrcp.pop %v210
    %v213 = vmul.f32 1.0, %v212
    %v214 = vrcp.pop %v211
    %v215 = vmul.f32 1.0, %v214
    %s216 = scalar_lea.vmem %s8, 32
    %217 = vst [vmem:[%s216] sm:$0xff] %v213
    %218 = vst [vmem:[%s216 + $0x8] sm:$0xff] %v215
    %s219 = sld [smem:[#allocation3 + $0x3]]
    %v220 = vld [vmem:[%s0] sm:$0xff]
    %v221 = vld [vmem:[%s0 + $0x8] sm:$0xff]
    %v222 = vstv %s219
    %v223 = vmul.f32 %v222, %v220
    %v224 = vmul.f32 %v222, %v221
    %s225 = sld [smem:[#allocation5 + $0x3]]
    %v226 = vstv %s225
    %v227 = vadd.f32 %v223, %v226
    %v228 = vadd.f32 %v224, %v226
    %s229 = sld [smem:[#allocation3 + $0x83]]
    %v230 = vld [vmem:[%s81] sm:$0xff]
    %v231 = vld [vmem:[%s81 + $0x8] sm:$0xff]
    %v232 = vstv %s229
    %v233 = vmul.f32 %v232, %v230
    %v234 = vmul.f32 %v232, %v231
    %v235 = vadd.f32 %v227, %v233
    %v236 = vadd.f32 %v228, %v234
    %s237 = sld [smem:[#allocation3 + $0x103]]
    %v238 = vld [vmem:[%s90] sm:$0xff]
    %v239 = vld [vmem:[%s90 + $0x8] sm:$0xff]
    %v240 = vstv %s237
    %v241 = vmul.f32 %v240, %v238
    %v242 = vmul.f32 %v240, %v239
    %v243 = vadd.f32 %v235, %v241
    %v244 = vadd.f32 %v236, %v242
    %s245 = sld [smem:[#allocation3 + $0x183]]
    %v246 = vld [vmem:[%s99] sm:$0xff]
    %v247 = vld [vmem:[%s99 + $0x8] sm:$0xff]
    %v248 = vstv %s245
    %v249 = vmul.f32 %v248, %v246
    %v250 = vmul.f32 %v248, %v247
    %v251 = vadd.f32 %v243, %v249
    %v252 = vadd.f32 %v244, %v250
    %v253 = vxor.u32 %v251, 2147483648
    %v254 = vxor.u32 %v252, 2147483648
    %v255 = vmul.f32 %v253, 1.442695
    %v256 = vpow.pop %v255
    %v257 = vmul.f32 %v254, 1.442695
    %v258 = vpow.pop %v257
    %v259 = vadd.f32 %v256, 1.0
    %v260 = vadd.f32 %v258, 1.0
    %v261 = vrcp.pop %v259
    %v262 = vmul.f32 1.0, %v261
    %v263 = vrcp.pop %v260
    %v264 = vmul.f32 1.0, %v263
    %s265 = scalar_lea.vmem %s8, 48
    %266 = vst [vmem:[%s265] sm:$0xff] %v262
    %267 = vst [vmem:[%s265 + $0x8] sm:$0xff] %v264
    %s268 = sld [smem:[#allocation3 + $0x4]]
    %v269 = vld [vmem:[%s0] sm:$0xff]
    %v270 = vld [vmem:[%s0 + $0x8] sm:$0xff]
    %v271 = vstv %s268
    %v272 = vmul.f32 %v271, %v269
    %v273 = vmul.f32 %v271, %v270
    %s274 = sld [smem:[#allocation5 + $0x4]]
    %v275 = vstv %s274
    %v276 = vadd.f32 %v272, %v275
    %v277 = vadd.f32 %v273, %v275
    %s278 = sld [smem:[#allocation3 + $0x84]]
    %v279 = vld [vmem:[%s81] sm:$0xff]
    %v280 = vld [vmem:[%s81 + $0x8] sm:$0xff]
    %v281 = vstv %s278
    %v282 = vmul.f32 %v281, %v279
    %v283 = vmul.f32 %v281, %v280
    %v284 = vadd.f32 %v276, %v282
    %v285 = vadd.f32 %v277, %v283
    %s286 = sld [smem:[#allocation3 + $0x104]]
    %v287 = vld [vmem:[%s90] sm:$0xff]
    %v288 = vld [vmem:[%s90 + $0x8] sm:$0xff]
    %v289 = vstv %s286
    %v290 = vmul.f32 %v289, %v287
    %v291 = vmul.f32 %v289, %v288
    %v292 = vadd.f32 %v284, %v290
    %v293 = vadd.f32 %v285, %v291
    %s294 = sld [smem:[#allocation3 + $0x184]]
    %v295 = vld [vmem:[%s99] sm:$0xff]
    %v296 = vld [vmem:[%s99 + $0x8] sm:$0xff]
    %v297 = vstv %s294
    %v298 = vmul.f32 %v297, %v295
    %v299 = vmul.f32 %v297, %v296
    %v300 = vadd.f32 %v292, %v298
    %v301 = vadd.f32 %v293, %v299
    %v302 = vxor.u32 %v300, 2147483648
    %v303 = vxor.u32 %v301, 2147483648
    %v304 = vmul.f32 %v302, 1.442695
    %v305 = vpow.pop %v304
    %v306 = vmul.f32 %v303, 1.442695
    %v307 = vpow.pop %v306
    %v308 = vadd.f32 %v305, 1.0
    %v309 = vadd.f32 %v307, 1.0
    %v310 = vrcp.pop %v308
    %v311 = vmul.f32 1.0, %v310
    %v312 = vrcp.pop %v309
    %v313 = vmul.f32 1.0, %v312
    %s314 = scalar_lea.vmem %s8, 64
    %315 = vst [vmem:[%s314] sm:$0xff] %v311
    %316 = vst [vmem:[%s314 + $0x8] sm:$0xff] %v313
    %s317 = sld [smem:[#allocation3 + $0x5]]
    %v318 = vld [vmem:[%s0] sm:$0xff]
    %v319 = vld [vmem:[%s0 + $0x8] sm:$0xff]
    %v320 = vstv %s317
    %v321 = vmul.f32 %v320, %v318
    %v322 = vmul.f32 %v320, %v319
    %s323 = sld [smem:[#allocation5 + $0x5]]
    %v324 = vstv %s323
    %v325 = vadd.f32 %v321, %v324
    %v326 = vadd.f32 %v322, %v324
    %s327 = sld [smem:[#allocation3 + $0x85]]
    %v328 = vld [vmem:[%s81] sm:$0xff]
    %v329 = vld [vmem:[%s81 + $0x8] sm:$0xff]
    %v330 = vstv %s327
    %v331 = vmul.f32 %v330, %v328
    %v332 = vmul.f32 %v330, %v329
    %v333 = vadd.f32 %v325, %v331
    %v334 = vadd.f32 %v326, %v332
    %s335 = sld [smem:[#allocation3 + $0x105]]
    %v336 = vld [vmem:[%s90] sm:$0xff]
    %v337 = vld [vmem:[%s90 + $0x8] sm:$0xff]
    %v338 = vstv %s335
    %v339 = vmul.f32 %v338, %v336
    %v340 = vmul.f32 %v338, %v337
    %v341 = vadd.f32 %v333, %v339
    %v342 = vadd.f32 %v334, %v340
    %s343 = sld [smem:[#allocation3 + $0x185]]
    %v344 = vld [vmem:[%s99] sm:$0xff]
    %v345 = vld [vmem:[%s99 + $0x8] sm:$0xff]
    %v346 = vstv %s343
    %v347 = vmul.f32 %v346, %v344
    %v348 = vmul.f32 %v346, %v345
    %v349 = vadd.f32 %v341, %v347
    %v350 = vadd.f32 %v342, %v348
    %v351 = vxor.u32 %v349, 2147483648
    %v352 = vxor.u32 %v350, 2147483648
    %v353 = vmul.f32 %v351, 1.442695
    %v354 = vpow.pop %v353
    %v355 = vmul.f32 %v352, 1.442695
    %v356 = vpow.pop %v355
    %v357 = vadd.f32 %v354, 1.0
    %v358 = vadd.f32 %v356, 1.0
    %v359 = vrcp.pop %v357
    %v360 = vmul.f32 1.0, %v359
    %v361 = vrcp.pop %v358
    %v362 = vmul.f32 1.0, %v361
    %s363 = scalar_lea.vmem %s8, 80
    %364 = vst [vmem:[%s363] sm:$0xff] %v360
    %365 = vst [vmem:[%s363 + $0x8] sm:$0xff] %v362
    %s366 = sld [smem:[#allocation3 + $0x6]]
    %v367 = vld [vmem:[%s0] sm:$0xff]
    %v368 = vld [vmem:[%s0 + $0x8] sm:$0xff]
    %v369 = vstv %s366
    %v370 = vmul.f32 %v369, %v367
    %v371 = vmul.f32 %v369, %v368
    %s372 = sld [smem:[#allocation5 + $0x6]]
    %v373 = vstv %s372
    %v374 = vadd.f32 %v370, %v373
    %v375 = vadd.f32 %v371, %v373
    %s376 = sld [smem:[#allocation3 + $0x86]]
    %v377 = vld [vmem:[%s81] sm:$0xff]
    %v378 = vld [vmem:[%s81 + $0x8] sm:$0xff]
    %v379 = vstv %s376
    %v380 = vmul.f32 %v379, %v377
    %v381 = vmul.f32 %v379, %v378
    %v382 = vadd.f32 %v374, %v380
    %v383 = vadd.f32 %v375, %v381
    %s384 = sld [smem:[#allocation3 + $0x106]]
    %v385 = vld [vmem:[%s90] sm:$0xff]
    %v386 = vld [vmem:[%s90 + $0x8] sm:$0xff]
    %v387 = vstv %s384
    %v388 = vmul.f32 %v387, %v385
    %v389 = vmul.f32 %v387, %v386
    %v390 = vadd.f32 %v382, %v388
    %v391 = vadd.f32 %v383, %v389
    %s392 = sld [smem:[#allocation3 + $0x186]]
    %v393 = vld [vmem:[%s99] sm:$0xff]
    %v394 = vld [vmem:[%s99 + $0x8] sm:$0xff]
    %v395 = vstv %s392
    %v396 = vmul.f32 %v395, %v393
    %v397 = vmul.f32 %v395, %v394
    %v398 = vadd.f32 %v390, %v396
    %v399 = vadd.f32 %v391, %v397
    %v400 = vxor.u32 %v398, 2147483648
    %v401 = vxor.u32 %v399, 2147483648
    %v402 = vmul.f32 %v400, 1.442695
    %v403 = vpow.pop %v402
    %v404 = vmul.f32 %v401, 1.442695
    %v405 = vpow.pop %v404
    %v406 = vadd.f32 %v403, 1.0
    %v407 = vadd.f32 %v405, 1.0
    %v408 = vrcp.pop %v406
    %v409 = vmul.f32 1.0, %v408
    %v410 = vrcp.pop %v407
    %v411 = vmul.f32 1.0, %v410
    %s412 = scalar_lea.vmem %s8, 96
    %413 = vst [vmem:[%s412] sm:$0xff] %v409
    %414 = vst [vmem:[%s412 + $0x8] sm:$0xff] %v411
    %s415 = sld [smem:[#allocation3 + $0x7]]
    %v416 = vld [vmem:[%s0] sm:$0xff]
    %v417 = vld [vmem:[%s0 + $0x8] sm:$0xff]
    %v418 = vstv %s415
    %v419 = vmul.f32 %v418, %v416
    %v420 = vmul.f32 %v418, %v417
    %s421 = sld [smem:[#allocation5 + $0x7]]
    %v422 = vstv %s421
    %v423 = vadd.f32 %v419, %v422
    %v424 = vadd.f32 %v420, %v422
    %s425 = sld [smem:[#allocation3 + $0x87]]
    %v426 = vld [vmem:[%s81] sm:$0xff]
    %v427 = vld [vmem:[%s81 + $0x8] sm:$0xff]
    %v428 = vstv %s425
    %v429 = vmul.f32 %v428, %v426
    %v430 = vmul.f32 %v428, %v427
    %v431 = vadd.f32 %v423, %v429
    %v432 = vadd.f32 %v424, %v430
    %s433 = sld [smem:[#allocation3 + $0x107]]
    %v434 = vld [vmem:[%s90] sm:$0xff]
    %v435 = vld [vmem:[%s90 + $0x8] sm:$0xff]
    %v436 = vstv %s433
    %v437 = vmul.f32 %v436, %v434
    %v438 = vmul.f32 %v436, %v435
    %v439 = vadd.f32 %v431, %v437
    %v440 = vadd.f32 %v432, %v438
    %s441 = sld [smem:[#allocation3 + $0x187]]
    %v442 = vld [vmem:[%s99] sm:$0xff]
    %v443 = vld [vmem:[%s99 + $0x8] sm:$0xff]
    %v444 = vstv %s441
    %v445 = vmul.f32 %v444, %v442
    %v446 = vmul.f32 %v444, %v443
    %v447 = vadd.f32 %v439, %v445
    %v448 = vadd.f32 %v440, %v446
    %v449 = vxor.u32 %v447, 2147483648
    %v450 = vxor.u32 %v448, 2147483648
    %v451 = vmul.f32 %v449, 1.442695
    %v452 = vpow.pop %v451
    %v453 = vmul.f32 %v450, 1.442695
    %v454 = vpow.pop %v453
    %v455 = vadd.f32 %v452, 1.0
    %v456 = vadd.f32 %v454, 1.0
    %v457 = vrcp.pop %v455
    %v458 = vmul.f32 1.0, %v457
    %v459 = vrcp.pop %v456
    %v460 = vmul.f32 1.0, %v459
    %s461 = scalar_lea.vmem %s8, 112
    %462 = vst [vmem:[%s461] sm:$0xff] %v458
    %463 = vst [vmem:[%s461 + $0x8] sm:$0xff] %v460
    %s464 = sld [smem:[#allocation3 + $0x8]]
    %v465 = vld [vmem:[%s0] sm:$0xff]
    %v466 = vld [vmem:[%s0 + $0x8] sm:$0xff]
    %v467 = vstv %s464
    %v468 = vmul.f32 %v467, %v465
    %v469 = vmul.f32 %v467, %v466
    %s470 = sld [smem:[#allocation5 + $0x8]]
    %v471 = vstv %s470
    %v472 = vadd.f32 %v468, %v471
    %v473 = vadd.f32 %v469, %v471
    %s474 = sld [smem:[#allocation3 + $0x88]]
    %v475 = vld [vmem:[%s81] sm:$0xff]
    %v476 = vld [vmem:[%s81 + $0x8] sm:$0xff]
    %v477 = vstv %s474
    %v478 = vmul.f32 %v477, %v475
    %v479 = vmul.f32 %v477, %v476
    %v480 = vadd.f32 %v472, %v478
    %v481 = vadd.f32 %v473, %v479
    %s482 = sld [smem:[#allocation3 + $0x108]]
    %v483 = vld [vmem:[%s90] sm:$0xff]
    %v484 = vld [vmem:[%s90 + $0x8] sm:$0xff]
    %v485 = vstv %s482
    %v486 = vmul.f32 %v485, %v483
    %v487 = vmul.f32 %v485, %v484
    %v488 = vadd.f32 %v480, %v486
    %v489 = vadd.f32 %v481, %v487
    %s490 = sld [smem:[#allocation3 + $0x188]]
    %v491 = vld [vmem:[%s99] sm:$0xff]
    %v492 = vld [vmem:[%s99 + $0x8] sm:$0xff]
    %v493 = vstv %s490
    %v494 = vmul.f32 %v493, %v491
    %v495 = vmul.f32 %v493, %v492
    %v496 = vadd.f32 %v488, %v494
    %v497 = vadd.f32 %v489, %v495
    %v498 = vxor.u32 %v496, 2147483648
    %v499 = vxor.u32 %v497, 2147483648
    %v500 = vmul.f32 %v498, 1.442695
    %v501 = vpow.pop %v500
    %v502 = vmul.f32 %v499, 1.442695
    %v503 = vpow.pop %v502
    %v504 = vadd.f32 %v501, 1.0
    %v505 = vadd.f32 %v503, 1.0
    %v506 = vrcp.pop %v504
    %v507 = vmul.f32 1.0, %v506
    %v508 = vrcp.pop %v505
    %v509 = vmul.f32 1.0, %v508
    %s510 = scalar_lea.vmem %s8, 128
    %511 = vst [vmem:[%s510] sm:$0xff] %v507
    %512 = vst [vmem:[%s510 + $0x8] sm:$0xff] %v509
    %v513 = vmul.f32 %v164, %v213
    %v514 = vmul.f32 %v166, %v215
    %v515 = vld [vmem:[%s2] sm:$0xff]
    %v516 = vld [vmem:[%s2 + $0x8] sm:$0xff]
    %v517 = vmul.f32 %v116, %v515
    %v518 = vmul.f32 %v118, %v516
    %v519 = vsub.f32 0.0, %v517
    %v520 = vsub.f32 0.0, %v518
    %v521 = vsub.f32 1.0, %v513
    %v522 = vsub.f32 1.0, %v514
    %v523 = vmax.f32 %v521, 1e-06
    %v524 = vmax.f32 %v522, 1e-06
    %v525 = vmin.f32 %v523, 1.0
    %v526 = vmin.f32 %v524, 1.0
    %v527 = vlog2.pop %v525
    %v528 = vmul.f32 %v527, 0.6931472
    %v529 = vlog2.pop %v526
    %v530 = vmul.f32 %v529, 0.6931472
    %v531 = vadd.f32 %v519, %v528
    %v532 = vadd.f32 %v520, %v530
    %v533 = vld [vmem:[%s3] sm:$0xff]
    %v534 = vld [vmem:[%s3 + $0x8] sm:$0xff]
    %vm535 = vcmask 130048
    %v537 = vsel %vm535, %v533, 0
    %v540 = vsel %vm535, %v534, 0
    %542 = vmatprep.subr.mxu0 0.0
    %543 = vmatpush1.msra.mxu0 %v531
    %544 = vmatprep.subr.mxu0 0.0
    %545 = vmatpush1.msra.mxu0 %v532
    %546 = vmatprep.subr.mxu0 0.0
    %547 = vmatpush1.msra.mxu0 0.0
    %548 = vmatprep.subr.mxu0 0.0
    %549 = vmatpush1.msra.mxu0 0.0
    %550 = vmatprep.subr.mxu0 0.0
    %551 = vmatpush1.msra.mxu0 0.0
    %552 = vmatprep.subr.mxu0 0.0
    %553 = vmatpush1.msra.mxu0 0.0
    %554 = vmatprep.subr.mxu0 0.0
    %555 = vmatpush1.msra.mxu0 0.0
    %556 = vmatprep.subr.mxu0 0.0
    %557 = vmatpush1.msra.mxu0 0.0
    %558 = vmatprep.subr.mxu0 0.0
    %559 = vmatpush1.msra.mxu0 0.0
    %560 = vmatprep.subr.mxu0 0.0
    %561 = vmatpush1.msra.mxu0 0.0
    %562 = vmatprep.subr.mxu0 0.0
    %563 = vmatpush1.msra.mxu0 0.0
    %564 = vmatprep.subr.mxu0 0.0
    %565 = vmatpush1.msra.mxu0 0.0
    %566 = vmatprep.subr.mxu0 0.0
    %567 = vmatpush1.msra.mxu0 0.0
    %568 = vmatprep.subr.mxu0 0.0
    %569 = vmatpush1.msra.mxu0 0.0
    %570 = vmatprep.subr.mxu0 0.0
    %571 = vmatpush1.msra.mxu0 0.0
    %572 = vmatprep.subr.mxu0 0.0
    %573 = vmatpush1.msra.mxu0 0.0
    %574 = vmatprep.subr.mxu0 0.0
    %575 = vmatpush1.msra.mxu0 0.0
    %576 = vmatprep.subr.mxu0 0.0
    %577 = vmatpush1.msra.mxu0 0.0
    %578 = vmatprep.subr.mxu0 0.0
    %579 = vmatpush1.msra.mxu0 0.0
    %580 = vmatprep.subr.mxu0 0.0
    %581 = vmatpush1.msra.mxu0 0.0
    %582 = vmatprep.subr.mxu0 0.0
    %583 = vmatpush1.msra.mxu0 0.0
    %584 = vmatprep.subr.mxu0 0.0
    %585 = vmatpush1.msra.mxu0 0.0
    %586 = vmatprep.subr.mxu0 0.0
    %587 = vmatpush1.msra.mxu0 0.0
    %588 = vmatprep.subr.mxu0 0.0
    %589 = vmatpush1.msra.mxu0 0.0
    %590 = vmatprep.subr.mxu0 0.0
    %591 = vmatpush1.msra.mxu0 0.0
    %592 = vmatprep.subr.mxu0 0.0
    %593 = vmatpush1.msra.mxu0 0.0
    %594 = vmatprep.subr.mxu0 0.0
    %595 = vmatpush1.msra.mxu0 0.0
    %596 = vmatprep.subr.mxu0 0.0
    %597 = vmatpush1.msra.mxu0 0.0
    %598 = vmatprep.subr.mxu0 0.0
    %599 = vmatpush1.msra.mxu0 0.0
    %600 = vmatprep.subr.mxu0 0.0
    %601 = vmatpush1.msra.mxu0 0.0
    %602 = vmatprep.subr.mxu0 0.0
    %603 = vmatpush1.msra.mxu0 0.0
    %604 = vmatprep.subr.mxu0 0.0
    %605 = vmatpush1.msra.mxu0 0.0
    %606 = vmatprep.mubr.f32.mxu0 0.0
    %607 = vmatmul.mubr.f32.gmra.mrb[0].mxu0 %v537
    %v608 = vpop.f32.mrb[0].mxu0
    %v609 = vadd.f32 0.0, %v608
    %v610 = vpop.f32.mrb[0].mxu0
    %611 = vmatprep.mubr.f32.mxu0 0.0
    %612 = vmatmul.mubr.f32.gmra.mrb[0].mxu0 %v540
    %v613 = vpop.f32.mrb[0].mxu0
    %v614 = vadd.f32 0.0, %v613
    %v615 = vpop.f32.mrb[0].mxu0
    %616 = vdwg.mxu0
    %v617 = vmul.f32 %v609, 1.442695
    %v618 = vpow.pop %v617
    %v619 = vmul.f32 %v614, 1.442695
    %v620 = vpow.pop %v619
    %v621 = vmul.f32 %v311, %v262
    %v622 = vmul.f32 %v313, %v264
    %v623 = vadd.f32 %v513, %v621
    %v624 = vadd.f32 %v514, %v622
    %v625 = vmul.f32 %v618, %v623
    %v626 = vmul.f32 %v620, %v624
    %627 = vst [vmem:[%s9] sm:$0xff] %v625
    %628 = vst [vmem:[%s9 + $0x8] sm:$0xff] %v626
    %v629 = vlaneseq
    %v630 = vand.u32 %v629, 127
    %s631 = smul.u32 0, 128
    %s632 = ssub.s32 32, %s631
    %v633 = vstv %s632
    %vm634 = vcmp.lt.s32.totalorder %v630, %v633
    %v635 = vsel %vm634, 1, 0
    %v636 = vcvt.s32.f32 %v635
    %v637 = vld [vmem:[%s1] sm:$0xff]
    %v638 = vld [vmem:[%s1 + $0x8] sm:$0xff]
    %v639 = vsub.f32 %v625, %v637
    %v640 = vsub.f32 %v626, %v638
    %v641 = vmul.f32 %v639, %v639
    %v642 = vmul.f32 %v640, %v640
    %v643 = vmul.f32 %v641, %v636
    %v644 = vmul.f32 %v642, %v636
    %v645 = vadd.f32 %v643, %v644
    %646 = vadd.xlane.f32.xlu0 %v645
    %v647 = vpop.xlane.xlu0 %646
    %v648 = vrot.slane %v647, 4
    %v649 = vadd.f32 %v647, %v648
    %v650 = vrot.slane %v649, 2
    %v651 = vadd.f32 %v649, %v650
    %v652 = vrot.slane %v651, 1
    %v653 = vadd.f32 %v651, %v652
    %s654 = vtos %v653
    %s655 = sadd.f32 %s654, 0.0
    %s656 = scalar_lea.vmem %s1, 16
    %v657 = vld [vmem:[%s656] sm:$0xff]
    %v658 = vld [vmem:[%s656 + $0x8] sm:$0xff]
    %v659 = vsub.f32 %v625, %v657
    %v660 = vsub.f32 %v626, %v658
    %v661 = vmul.f32 %v659, %v659
    %v662 = vmul.f32 %v660, %v660
    %v663 = vmul.f32 %v661, %v636
    %v664 = vmul.f32 %v662, %v636
    %v665 = vadd.f32 %v663, %v664
    %666 = vadd.xlane.f32.xlu0 %v665
    %v667 = vpop.xlane.xlu0 %666
    %v668 = vrot.slane %v667, 4
    %v669 = vadd.f32 %v667, %v668
    %v670 = vrot.slane %v669, 2
    %v671 = vadd.f32 %v669, %v670
    %v672 = vrot.slane %v671, 1
    %v673 = vadd.f32 %v671, %v672
    %s674 = vtos %v673
    %s675 = sadd.f32 %s655, %s674
    %s676 = scalar_lea.vmem %s1, 32
    %v677 = vld [vmem:[%s676] sm:$0xff]
    %v678 = vld [vmem:[%s676 + $0x8] sm:$0xff]
    %v679 = vsub.f32 %v625, %v677
    %v680 = vsub.f32 %v626, %v678
    %v681 = vmul.f32 %v679, %v679
    %v682 = vmul.f32 %v680, %v680
    %v683 = vmul.f32 %v681, %v636
    %v684 = vmul.f32 %v682, %v636
    %v685 = vadd.f32 %v683, %v684
    %686 = vadd.xlane.f32.xlu0 %v685
    %v687 = vpop.xlane.xlu0 %686
    %v688 = vrot.slane %v687, 4
    %v689 = vadd.f32 %v687, %v688
    %v690 = vrot.slane %v689, 2
    %v691 = vadd.f32 %v689, %v690
    %v692 = vrot.slane %v691, 1
    %v693 = vadd.f32 %v691, %v692
    %s694 = vtos %v693
    %s695 = sadd.f32 %s675, %s694
    %s696 = scalar_lea.vmem %s1, 48
    %v697 = vld [vmem:[%s696] sm:$0xff]
    %v698 = vld [vmem:[%s696 + $0x8] sm:$0xff]
    %v699 = vsub.f32 %v625, %v697
    %v700 = vsub.f32 %v626, %v698
    %v701 = vmul.f32 %v699, %v699
    %v702 = vmul.f32 %v700, %v700
    %v703 = vmul.f32 %v701, %v636
    %v704 = vmul.f32 %v702, %v636
    %v705 = vadd.f32 %v703, %v704
    %706 = vadd.xlane.f32.xlu0 %v705
    %v707 = vpop.xlane.xlu0 %706
    %v708 = vrot.slane %v707, 4
    %v709 = vadd.f32 %v707, %v708
    %v710 = vrot.slane %v709, 2
    %v711 = vadd.f32 %v709, %v710
    %v712 = vrot.slane %v711, 1
    %v713 = vadd.f32 %v711, %v712
    %s714 = vtos %v713
    %s715 = sadd.f32 %s695, %s714
    %s716 = sld [smem:[#allocation7]]
    %v717 = vstv %s716
    %v718 = vmul.f32 %v717, %v116
    %v719 = vmul.f32 %v717, %v118
    %s720 = sld [smem:[#allocation7 + $0x80]]
    %v721 = vstv %s720
    %v722 = vmul.f32 %v721, %v164
    %v723 = vmul.f32 %v721, %v166
    %v724 = vadd.f32 %v718, %v722
    %v725 = vadd.f32 %v719, %v723
    %s726 = sld [smem:[#allocation7 + $0x100]]
    %v727 = vstv %s726
    %v728 = vmul.f32 %v727, %v213
    %v729 = vmul.f32 %v727, %v215
    %v730 = vadd.f32 %v724, %v728
    %v731 = vadd.f32 %v725, %v729
    %s732 = sld [smem:[#allocation7 + $0x180]]
    %v733 = vstv %s732
    %v734 = vmul.f32 %v733, %v262
    %v735 = vmul.f32 %v733, %v264
    %v736 = vadd.f32 %v730, %v734
    %v737 = vadd.f32 %v731, %v735
    %s738 = sld [smem:[#allocation7 + $0x200]]
    %v739 = vstv %s738
    %v740 = vmul.f32 %v739, %v311
    %v741 = vmul.f32 %v739, %v313
    %v742 = vadd.f32 %v736, %v740
    %v743 = vadd.f32 %v737, %v741
    %s744 = sld [smem:[#allocation2]]
    %v745 = vstv %s744
    %v746 = vadd.f32 %v742, %v745
    %v747 = vadd.f32 %v743, %v745
    %s748 = sld [smem:[#allocation7 + $0x280]]
    %v749 = vld [vmem:[%s363] sm:$0xff]
    %v750 = vld [vmem:[%s363 + $0x8] sm:$0xff]
    %v751 = vstv %s748
    %v752 = vmul.f32 %v751, %v749
    %v753 = vmul.f32 %v751, %v750
    %v754 = vadd.f32 %v746, %v752
    %v755 = vadd.f32 %v747, %v753
    %v756 = vxor.u32 %v754, 2147483648
    %v757 = vxor.u32 %v755, 2147483648
    %v758 = vmul.f32 %v756, 1.442695
    %v759 = vpow.pop %v758
    %v760 = vmul.f32 %v757, 1.442695
    %v761 = vpow.pop %v760
    %v762 = vadd.f32 %v759, 1.0
    %v763 = vadd.f32 %v761, 1.0
    %v764 = vrcp.pop %v762
    %v765 = vmul.f32 1.0, %v764
    %v766 = vrcp.pop %v763
    %v767 = vmul.f32 1.0, %v766
    %768 = vst [vmem:[%s10] sm:$0xff] %v765
    %769 = vst [vmem:[%s10 + $0x8] sm:$0xff] %v767
    %v770 = vld [vmem:[%s0] sm:$0xff]
    %v771 = vld [vmem:[%s0 + $0x8] sm:$0xff]
    %v772 = vsub.f32 %v770, %v765
    %v773 = vsub.f32 %v771, %v767
    %v774 = vmul.f32 %v772, %v772
    %v775 = vmul.f32 %v773, %v773
    %v776 = vmul.f32 %v774, %v636
    %v777 = vmul.f32 %v775, %v636
    %v778 = vadd.f32 %v776, %v777
    %779 = vadd.xlane.f32.xlu0 %v778
    %v780 = vpop.xlane.xlu0 %779
    %v781 = vrot.slane %v780, 4
    %v782 = vadd.f32 %v780, %v781
    %v783 = vrot.slane %v782, 2
    %v784 = vadd.f32 %v782, %v783
    %v785 = vrot.slane %v784, 1
    %v786 = vadd.f32 %v784, %v785
    %s787 = vtos %v786
    %s788 = sadd.f32 %s787, 0.0
    %s789 = sld [smem:[#allocation7 + $0x280]]
    %v790 = vld [vmem:[%s412] sm:$0xff]
    %v791 = vld [vmem:[%s412 + $0x8] sm:$0xff]
    %v792 = vstv %s789
    %v793 = vmul.f32 %v792, %v790
    %v794 = vmul.f32 %v792, %v791
    %v795 = vadd.f32 %v746, %v793
    %v796 = vadd.f32 %v747, %v794
    %v797 = vxor.u32 %v795, 2147483648
    %v798 = vxor.u32 %v796, 2147483648
    %v799 = vmul.f32 %v797, 1.442695
    %v800 = vpow.pop %v799
    %v801 = vmul.f32 %v798, 1.442695
    %v802 = vpow.pop %v801
    %v803 = vadd.f32 %v800, 1.0
    %v804 = vadd.f32 %v802, 1.0
    %v805 = vrcp.pop %v803
    %v806 = vmul.f32 1.0, %v805
    %v807 = vrcp.pop %v804
    %v808 = vmul.f32 1.0, %v807
    %s809 = scalar_lea.vmem %s10, 16
    %810 = vst [vmem:[%s809] sm:$0xff] %v806
    %811 = vst [vmem:[%s809 + $0x8] sm:$0xff] %v808
    %v812 = vld [vmem:[%s81] sm:$0xff]
    %v813 = vld [vmem:[%s81 + $0x8] sm:$0xff]
    %v814 = vsub.f32 %v812, %v806
    %v815 = vsub.f32 %v813, %v808
    %v816 = vmul.f32 %v814, %v814
    %v817 = vmul.f32 %v815, %v815
    %v818 = vmul.f32 %v816, %v636
    %v819 = vmul.f32 %v817, %v636
    %v820 = vadd.f32 %v818, %v819
    %821 = vadd.xlane.f32.xlu0 %v820
    %v822 = vpop.xlane.xlu0 %821
    %v823 = vrot.slane %v822, 4
    %v824 = vadd.f32 %v822, %v823
    %v825 = vrot.slane %v824, 2
    %v826 = vadd.f32 %v824, %v825
    %v827 = vrot.slane %v826, 1
    %v828 = vadd.f32 %v826, %v827
    %s829 = vtos %v828
    %s830 = sadd.f32 %s788, %s829
    %s831 = sld [smem:[#allocation7 + $0x280]]
    %v832 = vld [vmem:[%s461] sm:$0xff]
    %v833 = vld [vmem:[%s461 + $0x8] sm:$0xff]
    %v834 = vstv %s831
    %v835 = vmul.f32 %v834, %v832
    %v836 = vmul.f32 %v834, %v833
    %v837 = vadd.f32 %v746, %v835
    %v838 = vadd.f32 %v747, %v836
    %v839 = vxor.u32 %v837, 2147483648
    %v840 = vxor.u32 %v838, 2147483648
    %v841 = vmul.f32 %v839, 1.442695
    %v842 = vpow.pop %v841
    %v843 = vmul.f32 %v840, 1.442695
    %v844 = vpow.pop %v843
    %v845 = vadd.f32 %v842, 1.0
    %v846 = vadd.f32 %v844, 1.0
    %v847 = vrcp.pop %v845
    %v848 = vmul.f32 1.0, %v847
    %v849 = vrcp.pop %v846
    %v850 = vmul.f32 1.0, %v849
    %s851 = scalar_lea.vmem %s10, 32
    %852 = vst [vmem:[%s851] sm:$0xff] %v848
    %853 = vst [vmem:[%s851 + $0x8] sm:$0xff] %v850
    %v854 = vld [vmem:[%s90] sm:$0xff]
    %v855 = vld [vmem:[%s90 + $0x8] sm:$0xff]
    %v856 = vsub.f32 %v854, %v848
    %v857 = vsub.f32 %v855, %v850
    %v858 = vmul.f32 %v856, %v856
    %v859 = vmul.f32 %v857, %v857
    %v860 = vmul.f32 %v858, %v636
    %v861 = vmul.f32 %v859, %v636
    %v862 = vadd.f32 %v860, %v861
    %863 = vadd.xlane.f32.xlu0 %v862
    %v864 = vpop.xlane.xlu0 %863
    %v865 = vrot.slane %v864, 4
    %v866 = vadd.f32 %v864, %v865
    %v867 = vrot.slane %v866, 2
    %v868 = vadd.f32 %v866, %v867
    %v869 = vrot.slane %v868, 1
    %v870 = vadd.f32 %v868, %v869
    %s871 = vtos %v870
    %s872 = sadd.f32 %s830, %s871
    %s873 = sld [smem:[#allocation7 + $0x280]]
    %v874 = vld [vmem:[%s510] sm:$0xff]
    %v875 = vld [vmem:[%s510 + $0x8] sm:$0xff]
    %v876 = vstv %s873
    %v877 = vmul.f32 %v876, %v874
    %v878 = vmul.f32 %v876, %v875
    %v879 = vadd.f32 %v746, %v877
    %v880 = vadd.f32 %v747, %v878
    %v881 = vxor.u32 %v879, 2147483648
    %v882 = vxor.u32 %v880, 2147483648
    %v883 = vmul.f32 %v881, 1.442695
    %v884 = vpow.pop %v883
    %v885 = vmul.f32 %v882, 1.442695
    %v886 = vpow.pop %v885
    %v887 = vadd.f32 %v884, 1.0
    %v888 = vadd.f32 %v886, 1.0
    %v889 = vrcp.pop %v887
    %v890 = vmul.f32 1.0, %v889
    %v891 = vrcp.pop %v888
    %v892 = vmul.f32 1.0, %v891
    %s893 = scalar_lea.vmem %s10, 48
    %894 = vst [vmem:[%s893] sm:$0xff] %v890
    %895 = vst [vmem:[%s893 + $0x8] sm:$0xff] %v892
    %v896 = vld [vmem:[%s99] sm:$0xff]
    %v897 = vld [vmem:[%s99 + $0x8] sm:$0xff]
    %v898 = vsub.f32 %v896, %v890
    %v899 = vsub.f32 %v897, %v892
    %v900 = vmul.f32 %v898, %v898
    %v901 = vmul.f32 %v899, %v899
    %v902 = vmul.f32 %v900, %v636
    %v903 = vmul.f32 %v901, %v636
    %v904 = vadd.f32 %v902, %v903
    %905 = vadd.xlane.f32.xlu0 %v904
    %v906 = vpop.xlane.xlu0 %905
    %v907 = vrot.slane %v906, 4
    %v908 = vadd.f32 %v906, %v907
    %v909 = vrot.slane %v908, 2
    %v910 = vadd.f32 %v908, %v909
    %v911 = vrot.slane %v910, 1
    %v912 = vadd.f32 %v910, %v911
    %s913 = vtos %v912
    %s914 = sadd.f32 %s872, %s913
    %v915 = vlaneseq
    %v916 = vshrl.u32 %v915, 7
    %vm917 = vcmp.eq.s32.totalorder %v916, 0
    %vm918 = vcmp.eq.s32.totalorder %v916, 1
    %v919 = vstv %s914
    %v920 = vsel %vm918, %v919, 0.0
    %v921 = vstv %s715
    %v922 = vsel %vm917, %v921, %v920
    %923 = vst [vmem:[%s11] sm:$0xff] %v922
    // Predicated region
    $region46: #{_forward.1} parent=1 // pred_check
      _
    $region47: #{_forward.1} parent=1 // pred_check_branch
      %925 = sbr.rel (0) target = $region49
    $region48: #{_forward.1} parent=1 // pred_region
      _
    $region49: #{_forward.1} parent=1 // pred_fallthru
      _
    // Predicated region
    $region50: #{_forward.1} parent=1 // pred_check
      _
    $region51: #{_forward.1} parent=1 // pred_check_branch
      %927 = sbr.rel (0) target = $region53
    $region52: #{_forward.1} parent=1 // pred_region
      _
    $region53: #{_forward.1} parent=1 // pred_fallthru
      _
    // Predicated region
    $region54: #{_forward.1} parent=1 // pred_check
      _
    $region55: #{_forward.1} parent=1 // pred_check_branch
      %929 = sbr.rel (0) target = $region57
    $region56: #{_forward.1} parent=1 // pred_region
      _
    $region57: #{_forward.1} parent=1 // pred_fallthru
      _
    // Predicated region
    $region58: #{_forward.1} parent=1 // pred_check
      _
    $region59: #{_forward.1} parent=1 // pred_check_branch
      %931 = sbr.rel (0) target = $region61
    $region60: #{_forward.1} parent=1 // pred_region
      _
    $region61: #{_forward.1} parent=1 // pred_fallthru
      _
    // Predicated region
    $region62: #{_forward.1} parent=1 // pred_check
      _
    $region63: #{_forward.1} parent=1 // pred_check_branch
      %933 = sbr.rel (0) target = $region65
    $region64: #{_forward.1} parent=1 // pred_region
      _
    $region65: #{_forward.1} parent=1 // pred_fallthru
      _
    // Predicated region
    $region66: #{_forward.1} parent=1 // pred_check
      _
    $region67: #{_forward.1} parent=1 // pred_check_branch
      %935 = sbr.rel (0) target = $region69
    $region68: #{_forward.1} parent=1 // pred_region
      _
    $region69: #{_forward.1} parent=1 // pred_fallthru
      _
    // Predicated region
    $region70: #{_forward.1} parent=1 // pred_check
      _
    $region71: #{_forward.1} parent=1 // pred_check_branch
      %937 = sbr.rel (0) target = $region73
    $region72: #{_forward.1} parent=1 // pred_region
      _
    $region73: #{_forward.1} parent=1 // pred_fallthru
      _
    // Predicated region
    $region74: #{_forward.1} parent=1 // pred_check
      _
    $region75: #{_forward.1} parent=1 // pred_check_branch
      %939 = sbr.rel (0) target = $region77
    $region76: #{_forward.1} parent=1 // pred_region
      _
    $region77: #{_forward.1} parent=1 // pred_fallthru
      _
    %940 = vsyncpa [#allocation4], 1
    %941 = vsyncpa [#allocation6], 1

// kernel: mul.96
$region0: #{mul.96}
  #allocation0 [shape = 's32[1]{0}', space=sflag, size = 0x4, scoped, tag = 'scoped memory for mul.96']
  %s0 = inlined_call_operand.vmem [shape: f32[2,4,16,16], index: 0, kind: input, shape index: {}, may-alias: {0,1}]
  %s1 = inlined_call_operand.vmem [shape: f32[2,4,16,16], index: 1, kind: input, shape index: {}, may-alias: {0,1}]
  %s2 = inlined_call_operand.vmem [shape: bf16[2,4,16,16], index: 2, kind: output, shape index: {}]
  %v3 = vld [vmem:[%s0] sm:$0xff]
  %v4 = vld [vmem:[%s1] sm:$0xff]
  %5 = xla_tuple %v3, %v4
  %6 = xla_tuple %5
  %v7 = vmul.f32 %v3, %v4
  %8 = xla_tuple %v7
  %v9 = vpack.c.bf16 0.0, %v7
  %10 = vst [vmem:[%s2] sm:$0xf] %v9
  %s11 = scalar_lea.vmem %s0, 64
  %v12 = vld [vmem:[%s11] sm:$0xff]
  %s13 = scalar_lea.vmem %s1, 64
  %v14 = vld [vmem:[%s13] sm:$0xff]
  %15 = xla_tuple %v12, %v14
  %16 = xla_tuple %15
  %v17 = vmul.f32 %v12, %v14
  %18 = xla_tuple %v17
  %s19 = scalar_lea.vmem %s2, 32
  %v20 = vpack.c.bf16 0.0, %v17
  %21 = vst [vmem:[%s19] sm:$0xf] %v20
  %s22 = scalar_lea.vmem %s0, 16
  %v23 = vld [vmem:[%s22] sm:$0xff]
  %s24 = scalar_lea.vmem %s1, 16
  %v25 = vld [vmem:[%s24] sm:$0xff]
  %26 = xla_tuple %v23, %v25
  %27 = xla_tuple %26
  %v28 = vmul.f32 %v23, %v25
  %29 = xla_tuple %v28
  %s30 = scalar_lea.vmem %s2, 8
  %v31 = vpack.c.bf16 0.0, %v28
  %32 = vst [vmem:[%s30] sm:$0xf] %v31
  %s33 = scalar_lea.vmem %s0, 80
  %v34 = vld [vmem:[%s33] sm:$0xff]
  %s35 = scalar_lea.vmem %s1, 80
  %v36 = vld [vmem:[%s35] sm:$0xff]
  %37 = xla_tuple %v34, %v36
  %38 = xla_tuple %37
  %v39 = vmul.f32 %v34, %v36
  %40 = xla_tuple %v39
  %s41 = scalar_lea.vmem %s2, 40
  %v42 = vpack.c.bf16 0.0, %v39
  %43 = vst [vmem:[%s41] sm:$0xf] %v42
  %s44 = scalar_lea.vmem %s0, 32
  %v45 = vld [vmem:[%s44] sm:$0xff]
  %s46 = scalar_lea.vmem %s1, 32
  %v47 = vld [vmem:[%s46] sm:$0xff]
  %48 = xla_tuple %v45, %v47
  %49 = xla_tuple %48
  %v50 = vmul.f32 %v45, %v47
  %51 = xla_tuple %v50
  %s52 = scalar_lea.vmem %s2, 16
  %v53 = vpack.c.bf16 0.0, %v50
  %54 = vst [vmem:[%s52] sm:$0xf] %v53
  %s55 = scalar_lea.vmem %s0, 96
  %v56 = vld [vmem:[%s55] sm:$0xff]
  %s57 = scalar_lea.vmem %s1, 96
  %v58 = vld [vmem:[%s57] sm:$0xff]
  %59 = xla_tuple %v56, %v58
  %60 = xla_tuple %59
  %v61 = vmul.f32 %v56, %v58
  %62 = xla_tuple %v61
  %s63 = scalar_lea.vmem %s2, 48
  %v64 = vpack.c.bf16 0.0, %v61
  %65 = vst [vmem:[%s63] sm:$0xf] %v64
  %s66 = scalar_lea.vmem %s0, 48
  %v67 = vld [vmem:[%s66] sm:$0xff]
  %s68 = scalar_lea.vmem %s1, 48
  %v69 = vld [vmem:[%s68] sm:$0xff]
  %70 = xla_tuple %v67, %v69
  %71 = xla_tuple %70
  %v72 = vmul.f32 %v67, %v69
  %73 = xla_tuple %v72
  %s74 = scalar_lea.vmem %s2, 24
  %v75 = vpack.c.bf16 0.0, %v72
  %76 = vst [vmem:[%s74] sm:$0xf] %v75
  %s77 = scalar_lea.vmem %s0, 112
  %v78 = vld [vmem:[%s77] sm:$0xff]
  %s79 = scalar_lea.vmem %s1, 112
  %v80 = vld [vmem:[%s79] sm:$0xff]
  %81 = xla_tuple %v78, %v80
  %82 = xla_tuple %81
  %v83 = vmul.f32 %v78, %v80
  %84 = xla_tuple %v83
  %s85 = scalar_lea.vmem %s2, 56
  %v86 = vpack.c.bf16 0.0, %v83
  %87 = vst [vmem:[%s85] sm:$0xf] %v86
  %s88 = scalar_lea.vmem %s0, 8
  %v89 = vld [vmem:[%s88] sm:$0xff]
  %s90 = scalar_lea.vmem %s1, 8
  %v91 = vld [vmem:[%s90] sm:$0xff]
  %92 = xla_tuple %v89, %v91
  %93 = xla_tuple %92
  %v94 = vmul.f32 %v89, %v91
  %95 = xla_tuple %v94
  %s96 = scalar_lea.vmem %s2, 4
  %v97 = vpack.c.bf16 0.0, %v94
  %98 = vst [vmem:[%s96] sm:$0xf] %v97
  %s99 = scalar_lea.vmem %s0, 72
  %v100 = vld [vmem:[%s99] sm:$0xff]
  %s101 = scalar_lea.vmem %s1, 72
  %v102 = vld [vmem:[%s101] sm:$0xff]
  %103 = xla_tuple %v100, %v102
  %104 = xla_tuple %103
  %v105 = vmul.f32 %v100, %v102
  %106 = xla_tuple %v105
  %s107 = scalar_lea.vmem %s2, 36
  %v108 = vpack.c.bf16 0.0, %v105
  %109 = vst [vmem:[%s107] sm:$0xf] %v108
  %s110 = scalar_lea.vmem %s0, 24
  %v111 = vld [vmem:[%s110] sm:$0xff]
  %s112 = scalar_lea.vmem %s1, 24
  %v113 = vld [vmem:[%s112] sm:$0xff]
  %114 = xla_tuple %v111, %v113
  %115 = xla_tuple %114
  %v116 = vmul.f32 %v111, %v113
  %117 = xla_tuple %v116
  %s118 = scalar_lea.vmem %s2, 12
  %v119 = vpack.c.bf16 0.0, %v116
  %120 = vst [vmem:[%s118] sm:$0xf] %v119
  %s121 = scalar_lea.vmem %s0, 88
  %v122 = vld [vmem:[%s121] sm:$0xff]
  %s123 = scalar_lea.vmem %s1, 88
  %v124 = vld [vmem:[%s123] sm:$0xff]
  %125 = xla_tuple %v122, %v124
  %126 = xla_tuple %125
  %v127 = vmul.f32 %v122, %v124
  %128 = xla_tuple %v127
  %s129 = scalar_lea.vmem %s2, 44
  %v130 = vpack.c.bf16 0.0, %v127
  %131 = vst [vmem:[%s129] sm:$0xf] %v130
  %s132 = scalar_lea.vmem %s0, 40
  %v133 = vld [vmem:[%s132] sm:$0xff]
  %s134 = scalar_lea.vmem %s1, 40
  %v135 = vld [vmem:[%s134] sm:$0xff]
  %136 = xla_tuple %v133, %v135
  %137 = xla_tuple %136
  %v138 = vmul.f32 %v133, %v135
  %139 = xla_tuple %v138
  %s140 = scalar_lea.vmem %s2, 20
  %v141 = vpack.c.bf16 0.0, %v138
  %142 = vst [vmem:[%s140] sm:$0xf] %v141
  %s143 = scalar_lea.vmem %s0, 104
  %v144 = vld [vmem:[%s143] sm:$0xff]
  %s145 = scalar_lea.vmem %s1, 104
  %v146 = vld [vmem:[%s145] sm:$0xff]
  %147 = xla_tuple %v144, %v146
  %148 = xla_tuple %147
  %v149 = vmul.f32 %v144, %v146
  %150 = xla_tuple %v149
  %s151 = scalar_lea.vmem %s2, 52
  %v152 = vpack.c.bf16 0.0, %v149
  %153 = vst [vmem:[%s151] sm:$0xf] %v152
  %s154 = scalar_lea.vmem %s0, 56
  %v155 = vld [vmem:[%s154] sm:$0xff]
  %s156 = scalar_lea.vmem %s1, 56
  %v157 = vld [vmem:[%s156] sm:$0xff]
  %158 = xla_tuple %v155, %v157
  %159 = xla_tuple %158
  %v160 = vmul.f32 %v155, %v157
  %161 = xla_tuple %v160
  %s162 = scalar_lea.vmem %s2, 28
  %v163 = vpack.c.bf16 0.0, %v160
  %164 = vst [vmem:[%s162] sm:$0xf] %v163
  %s165 = scalar_lea.vmem %s0, 120
  %v166 = vld [vmem:[%s165] sm:$0xff]
  %s167 = scalar_lea.vmem %s1, 120
  %v168 = vld [vmem:[%s167] sm:$0xff]
  %169 = xla_tuple %v166, %v168
  %170 = xla_tuple %169
  %v171 = vmul.f32 %v166, %v168
  %172 = xla_tuple %v171
  %s173 = scalar_lea.vmem %s2, 60
  %v174 = vpack.c.bf16 0.0, %v171
  %175 = vst [vmem:[%s173] sm:$0xf] %v174

</llo_original>
